<compile_context>
chip_gen: v7x
topology: tpu7x:2x2x1
jax: 0.10.0
libtpu: 0.0.40
codegen_flags: <defaults>
</compile_context>

<pallas_src>
import jax
import jax.numpy as jnp
from jax.experimental import pallas as pl
from jax.experimental.pallas import tpu as pltpu


def _proto_matcher_kernel(q_ref, p_ref, o_ref):
    """q_ref: (1, Tq, D), p_ref: (1, 1, D), o_ref: (1, 1, Tq)."""
    q = q_ref[...]                        # native dtype (bf16 stays bf16)
    p = p_ref[...]                        # (1, 1, D), broadcasts over Tq
    diff = q - p                          # VPU elementwise in native dtype
    d32 = diff.astype(jnp.float32)        # accumulate squares in f32
    sq = jnp.sum(d32 * d32, axis=-1)      # (1, Tq) lane reduction (XLU)
    scores = (-jnp.sqrt(sq)).astype(o_ref.dtype)
    o_ref[...] = scores[:, None, :]       # (1, 1, Tq) lane-dense store


def _choose_tq(Q, D, itemsize):
    """Largest lane-dense query tile whose double-buffered block fits VMEM."""
    target_block_bytes = 4 * 1024 * 1024          # ~4 MiB/block, x2 double-buffer
    rows = target_block_bytes // max(1, D * itemsize)
    tq = (int(rows) // 128) * 128
    tq = max(128, min(tq, 2048))
    if Q <= tq:
        return Q                                   # full extent: always legal
    return tq


def _proto_matcher_pallas(query, proto_):
    """query: (B, Q, D); proto_: (B, 1, D) -> scores (B, Q)."""
    B, Q, D = query.shape
    tq = _choose_tq(Q, D, query.dtype.itemsize)
    grid = (B, pl.cdiv(Q, tq))

    # Explicit VMEM budget: 2x-buffered query + resident proto + output blocks,
    # with ~3x headroom, capped well below v7x's 64 MiB physical VMEM.
    block_bytes = (tq * D * query.dtype.itemsize
                   + D * proto_.dtype.itemsize
                   + tq * query.dtype.itemsize)
    vmem_limit = int(min(max(8 * 1024 * 1024, 6 * block_bytes),
                         48 * 1024 * 1024))

    cost = pl.CostEstimate(
        flops=3 * B * Q * D + B * Q,                          # sub, mul, add + neg
        transcendentals=B * Q,                                # sqrt
        bytes_accessed=(B * Q * D * query.dtype.itemsize
                        + B * D * proto_.dtype.itemsize
                        + B * Q * query.dtype.itemsize),
    )

    out = pl.pallas_call(
        _proto_matcher_kernel,
        out_shape=jax.ShapeDtypeStruct((B, 1, Q), query.dtype),
        grid=grid,
        in_specs=[
            # query streamed in (1, Tq, D) blocks (double-buffered by Pallas).
            pl.BlockSpec((1, tq, D), lambda b, qi: (b, qi, 0)),
            # proto block index is independent of the Q-tile axis -> resident.
            pl.BlockSpec((1, 1, D), lambda b, qi: (b, 0, 0)),
        ],
        out_specs=pl.BlockSpec((1, 1, tq), lambda b, qi: (b, 0, qi)),
        compiler_params=pltpu.CompilerParams(
            dimension_semantics=("parallel", "parallel"),
            vmem_limit_bytes=vmem_limit,
        ),
        cost_estimate=cost,
    )(query, proto_)
    return out.reshape(B, Q)


def proto_matcher(query, proto, *, min_pallas_elems=32 * 1024):
    """query: (B, Q, D); proto: list/tuple of B arrays of shape (1, D)/(D,),
    or a pre-stacked array of shape (B, 1, D) / (B, D)."""
    query = jnp.asarray(query)
    B, Q, D = query.shape

    if isinstance(proto, (list, tuple)):
        proto_ = jnp.stack([jnp.asarray(p) for p in proto], axis=0)
    else:
        proto_ = jnp.asarray(proto)
    proto_ = proto_.reshape(proto_.shape[0], -1)
    assert proto_.shape == (B, D), (
        "ProtoMatcher broadcast requires len(proto) == batch_size and matching dim")
    proto_ = proto_.reshape(B, 1, D).astype(query.dtype)

    # Tiny problems: fixed pallas_call overhead dwarfs the compute; let XLA fuse.
    if B * Q * D < min_pallas_elems:
        diff = (query - proto_).astype(jnp.float32)
        return (-jnp.sqrt(jnp.sum(diff * diff, axis=-1))).astype(query.dtype)

    return _proto_matcher_pallas(query, proto_)


if __name__ == "__main__":
    key = jax.random.PRNGKey(0)
    kq, kp = jax.random.split(key)

    # Main shape: small but large enough to exercise the tiled Pallas path with
    # lane-dense (multiple-of-128) D and Q.
    B, Q, D = 2, 256, 128
    query = jax.random.normal(kq, (B, Q, D), dtype=jnp.float32)
    proto = [
        jax.random.normal(jax.random.fold_in(kp, i), (1, D), dtype=jnp.float32)
        for i in range(B)
    ]

    matcher = jax.jit(proto_matcher)
    scores = matcher(query, proto)
    jax.block_until_ready(scores)

    proto_arr = jnp.stack(proto, axis=0)                         # (B, 1, D)
    ref = -jnp.sqrt(jnp.sum((query - proto_arr) ** 2, axis=-1))  # (B, Q)
    assert scores.shape == (B, Q)
    assert jnp.allclose(scores, ref, atol=1e-3, rtol=1e-5), "f32 mismatch vs reference"

    # bf16 path: inputs stay bf16 on the load side, squares accumulate in f32.
    q16 = query.astype(jnp.bfloat16)
    p16 = [p.astype(jnp.bfloat16) for p in proto]
    s16 = jax.block_until_ready(matcher(q16, p16))
    assert s16.dtype == jnp.bfloat16
    assert jnp.allclose(s16.astype(jnp.float32), ref, atol=0.3, rtol=0.05), "bf16 mismatch"

    # Tiny shapes bypass Pallas (launch overhead > compute) via the jnp fallback.
    Bs, Qs, Ds = 2, 8, 32
    q_small = jax.random.normal(kq, (Bs, Qs, Ds), dtype=jnp.float32)
    p_small = [
        jax.random.normal(jax.random.fold_in(kp, 100 + i), (1, Ds), dtype=jnp.float32)
        for i in range(Bs)
    ]
    s_small = jax.block_until_ready(proto_matcher(q_small, p_small))
    ref_small = -jnp.sqrt(jnp.sum((q_small - jnp.stack(p_small, axis=0)) ** 2, axis=-1))
    assert jnp.allclose(s_small, ref_small, atol=1e-5), "fallback mismatch"

    print("KERNEL_OK")
</pallas_src>

<mosaic_0001>
module attributes {stable_mosaic.version = 11 : i64} {
  func.func @_proto_matcher_kernel(%arg0: i32, %arg1: i32, %arg2: memref<1x256x128xf32, #tpu.memory_space<vmem>>, %arg3: memref<1x1x128xf32, #tpu.memory_space<vmem>>, %arg4: memref<1x1x256xf32, #tpu.memory_space<vmem>>) attributes {dimension_semantics = [#tpu.dimension_semantics<parallel>, #tpu.dimension_semantics<parallel>], iteration_bounds = array<i64: 2, 1>, scalar_prefetch = 0 : i64, scratch_operands = 0 : i64, tpu.core_type = #tpu.core_type<tc>, window_params = [{transform_indices = @transform_0, window_bounds = array<i64: 1, 256, 128>}, {transform_indices = @transform_1, window_bounds = array<i64: 1, 1, 128>}, {transform_indices = @transform_2, window_bounds = array<i64: 1, 1, 256>}]} {
    %c0 = arith.constant 0 : index
    %c0_0 = arith.constant 0 : index
    %c0_1 = arith.constant 0 : index
    %0 = vector.load %arg2[%c0, %c0_0, %c0_1] : memref<1x256x128xf32, #tpu.memory_space<vmem>>, vector<1x256x128xf32>
    %c0_2 = arith.constant 0 : index
    %c0_3 = arith.constant 0 : index
    %c0_4 = arith.constant 0 : index
    %1 = vector.load %arg3[%c0_2, %c0_3, %c0_4] : memref<1x1x128xf32, #tpu.memory_space<vmem>>, vector<1x1x128xf32>
    %2 = vector.broadcast %1 : vector<1x1x128xf32> to vector<1x256x128xf32>
    %3 = arith.subf %0, %2 : vector<1x256x128xf32>
    %4 = arith.mulf %3, %3 : vector<1x256x128xf32>
    %cst = arith.constant dense<0.000000e+00> : vector<1x256xf32>
    %5 = vector.multi_reduction <add>, %4, %cst [2] : vector<1x256x128xf32> to vector<1x256xf32>
    %6 = math.sqrt %5 : vector<1x256xf32>
    %cst_5 = arith.constant 0.000000e+00 : f32
    %7 = vector.broadcast %cst_5 : f32 to vector<1x256xf32>
    %8 = arith.subf %7, %6 : vector<1x256xf32>
    %9 = vector.shape_cast %8 : vector<1x256xf32> to vector<1x1x256xf32>
    %c0_6 = arith.constant 0 : index
    %c0_7 = arith.constant 0 : index
    %c0_8 = arith.constant 0 : index
    %10 = vector.load %arg4[%c0_6, %c0_7, %c0_8] : memref<1x1x256xf32, #tpu.memory_space<vmem>>, vector<1x1x256xf32>
    tpu.vector_store %arg4[%c0_6, %c0_7, %c0_8], %9 {strides = array<i32>} : memref<1x1x256xf32, #tpu.memory_space<vmem>>, vector<1x1x256xf32>,
    return
  }
  func.func @transform_0(%arg0: i32, %arg1: i32) -> (i32, i32, i32) {
    %c0_i32 = arith.constant 0 : i32
    %c0_i32_0 = arith.constant 0 : i32
    return %arg0, %arg1, %c0_i32 : i32, i32, i32
  }
  func.func @transform_1(%arg0: i32, %arg1: i32) -> (i32, i32, i32) {
    %c0_i32 = arith.constant 0 : i32
    %c0_i32_0 = arith.constant 0 : i32
    %c0_i32_1 = arith.constant 0 : i32
    return %arg0, %c0_i32, %c0_i32_0 : i32, i32, i32
  }
  func.func @transform_2(%arg0: i32, %arg1: i32) -> (i32, i32, i32) {
    %c0_i32 = arith.constant 0 : i32
    %c0_i32_0 = arith.constant 0 : i32
    return %arg0, %c0_i32, %arg1 : i32, i32, i32
  }
}

</mosaic_0001>

<llo_original>
// kernel: proto_matcher.1
$region0: #{proto_matcher.1}
  #allocation0 [shape = 'u32[]', space=smem, size = 0x4, offset = 0x4, fixed_abs, tag = 'smem constant byte address 0x4 - core index']
  #allocation1 [shape = 'u32[144,128]{1,0:T(1,128)}', space=vmem, size = 0x12000, scoped, tag = 'internal scratch']
  %s0 = inlined_call_operand.hbm [shape: f32[2,256,128], index: 0, kind: input, shape index: {}]
  %s1 = inlined_call_operand.vmem [shape: f32[2,1,128], index: 1, kind: input, shape index: {}]
  %s2 = inlined_call_operand.vmem [shape: f32[2,1,256], index: 2, kind: output, shape index: {}]
  %s3 = sld [smem:[#allocation0]]
  $region45: #{proto_matcher.1} parent=0
    _
  %s5 = ssub.s32 1, %s3
  %s6 = scalar_select 0, %s5, %s3
  $region1: #{proto_matcher.1} parent=0
    #allocation2 [shape = 'u8[262144]{0}', space=vmem, size = 0x40000, scoped, tag = 'input window, operand 0']
    #allocation3 [shape = 's32[2]{0}', space=sflag, size = 0x8, scoped, tag = 'scoped memory for proto_matcher.1']
    %7 = vsyncpa [#allocation3], 0
    %s8 = scalar_lea.sflag [#allocation3], 1
    %9 = vsyncpa %s8, 0
    loop: start=0, step=1, limit=4
    $region2: #{proto_matcher.1} parent=1 // loop_pre_header
      _
    $region3: #{proto_matcher.1} parent=1 // loop_header
      %s11 = sphi 0, %s15
      %p12 = scmp.ge.s32.totalorder %s11, 4
      %s18 = sphi 0, %s30
      %s19 = sphi 0, %s26
      %s20 = sphi 0, %s18
      %s21 = sphi 0, %s19
      %s22 = sphi 0, %s20
      %s23 = sphi 0, %s21
      %s35 = sphi 0, %s37
      %s38 = sphi 0, %s35
      %s39 = sphi 0, %s38
      %s55 = sphi 0, %s39
      %s61 = sphi 0, %s63
      %s64 = sphi 0, %s61
      %s65 = sphi 0, %s64
      %s81 = sphi 0, %s65
      %s89 = sphi 0, %s91
      %s92 = sphi 0, %s89
      %s93 = sphi 0, %s92
      %s109 = sphi 0, %s93
    $region4: #{proto_matcher.1} parent=1 // loop_header_branch
      %14 = sbr.rel (%p12) target = $region8
    $region5: #{proto_matcher.1} parent=1 // loop_body
      %s16 = ssub.s32 %s11, 1
      %s17 = ssub.s32 %s11, 2
      %s24 = sadd.s32 1, %s19
      %p25 = scmp.ge.s32.totalorder %s24, 1
      %s26 = scalar_select %p25, 0, %s24
      %s27 = sadd.s32 1, %s18
      %s28 = scalar_select %p25, %s27, %s18
      %p29 = scmp.ge.s32.totalorder %s28, 2
      %s30 = scalar_select %p29, 0, %s28
      %s31 = ssub.s32 %s18, %s30
      %s32 = ssub.s32 %s19, %s26
      %s33 = sor.u32 %s31, %s32
      %p34 = scmp.eq.s32.totalorder %s33, 0
      %s36 = sadd.s32 %s35, 1
      %s37 = scalar_select %p34, %s35, %s36
      %p40 = pneg %p34
      %p41 = scmp.eq.s32.totalorder %s11, 1
      %p42 = por %p40, %p41
      %p43 = scmp.ne.s32.totalorder %s35, %s38
      %p44 = scmp.eq.s32.totalorder %s11, 0
      %p45 = por %p43, %p44
      %p46 = scmp.ne.s32.totalorder %s35, %s38
      %p47 = scmp.eq.s32.totalorder %s16, 1
      %p48 = por %p46, %p47
      %p49 = scmp.ne.s32.totalorder %s38, %s39
      %p50 = scmp.eq.s32.totalorder %s16, 0
      %p51 = por %p49, %p50
      %p52 = scmp.ne.s32.totalorder %s38, %s39
      %p53 = scmp.eq.s32.totalorder %s17, 1
      %p54 = por %p52, %p53
      %p56 = scmp.ne.s32.totalorder %s39, %s55
      %p57 = scmp.eq.s32.totalorder %s17, 0
      %p58 = por %p56, %p57
      %s59 = ssub.s32 %s18, %s30
      %p60 = scmp.eq.s32.totalorder %s59, 0
      %s62 = sadd.s32 %s61, 1
      %s63 = scalar_select %p60, %s61, %s62
      %p66 = pneg %p60
      %p67 = scmp.eq.s32.totalorder %s11, 1
      %p68 = por %p66, %p67
      %p69 = scmp.ne.s32.totalorder %s61, %s64
      %p70 = scmp.eq.s32.totalorder %s11, 0
      %p71 = por %p69, %p70
      %p72 = scmp.ne.s32.totalorder %s61, %s64
      %p73 = scmp.eq.s32.totalorder %s16, 1
      %p74 = por %p72, %p73
      %p75 = scmp.ne.s32.totalorder %s64, %s65
      %p76 = scmp.eq.s32.totalorder %s16, 0
      %p77 = por %p75, %p76
      %p78 = scmp.ne.s32.totalorder %s64, %s65
      %p79 = scmp.eq.s32.totalorder %s17, 1
      %p80 = por %p78, %p79
      %p82 = scmp.ne.s32.totalorder %s65, %s81
      %p83 = scmp.eq.s32.totalorder %s17, 0
      %p84 = por %p82, %p83
      %s85 = ssub.s32 %s18, %s30
      %s86 = ssub.s32 %s19, %s26
      %s87 = sor.u32 %s85, %s86
      %p88 = scmp.eq.s32.totalorder %s87, 0
      %s90 = sadd.s32 %s89, 1
      %s91 = scalar_select %p88, %s89, %s90
      %p94 = pneg %p88
      %p95 = scmp.eq.s32.totalorder %s11, 1
      %p96 = por %p94, %p95
      %p97 = scmp.ne.s32.totalorder %s89, %s92
      %p98 = scmp.eq.s32.totalorder %s11, 0
      %p99 = por %p97, %p98
      %p100 = scmp.ne.s32.totalorder %s89, %s92
      %p101 = scmp.eq.s32.totalorder %s16, 1
      %p102 = por %p100, %p101
      %p103 = scmp.ne.s32.totalorder %s92, %s93
      %p104 = scmp.eq.s32.totalorder %s16, 0
      %p105 = por %p103, %p104
      %p106 = scmp.ne.s32.totalorder %s92, %s93
      %p107 = scmp.eq.s32.totalorder %s17, 1
      %p108 = por %p106, %p107
      %p110 = scmp.ne.s32.totalorder %s93, %s109
      %p111 = scmp.eq.s32.totalorder %s17, 0
      %p112 = por %p110, %p111
      %p113 = scmp.le.s32.totalorder 1, %s11
      %p114 = scmp.lt.s32.totalorder %s11, 3
      %p115 = pnand %p113, %p114
      %p116 = pneg %p115
      // Predicated region
      $region9: #{proto_matcher.1} parent=5 // pred_check
        _
      $region10: #{proto_matcher.1} parent=5 // pred_check_branch
        %118 = sbr.rel (%p115) target = $region12
      $region11: #{proto_matcher.1} parent=5 // pred_region
        %s119 = ssub.s32 %s11, 1
      $region12: #{proto_matcher.1} parent=5 // pred_fallthru
        _
      %p120 = scmp.lt.s32.totalorder %s11, 2
      // Predicated region
      $region13: #{proto_matcher.1} parent=5 // pred_check
        %p121 = pneg %p120
      $region14: #{proto_matcher.1} parent=5 // pred_check_branch
        %123 = sbr.rel (%p121) target = $region16
      $region15: #{proto_matcher.1} parent=5 // pred_region
        // Predicated region
        $region17: #{proto_matcher.1} parent=15 // pred_check
          %p124 = pneg %p45
        $region18: #{proto_matcher.1} parent=15 // pred_check_branch
          %126 = sbr.rel (%p124) target = $region20
        $region19: #{proto_matcher.1} parent=15 // pred_region
          %s127 = sand.u32 %s35, 1
          %s128 = scalar_lea.sflag [#allocation3], %s127
          %s129 = sand.u32 %s35, 1
          %s130 = smul.addr %s129, 256
          %s131 = scalar_lea.vmem [#allocation2], %s130
          %s132 = smul.u32 32, %s19
          %s134 = ssub.s32 4096, 4096
          %135 = vsyncadd %s128, %s134
          %s136 = smul.addr %s18, 32
          %s137 = sadd.s32 %s132, %s136
          %s138 = smul.addr %s137, 128
          %s139 = scalar_lea.hbm %s0, %s138
          %s140 = sshll.u32 %s131, 4
          %s141 = int_to_ptr.vmem [resolvable:$true] %s140
          %146 = dma.hbm_to_vmem [thread:$0]  %s139, 4096, %s141, %s128, 128, 128, 8
        $region20: #{proto_matcher.1} parent=15 // pred_fallthru
          _
        // Predicated region
        $region21: #{proto_matcher.1} parent=15 // pred_check
          %p147 = pneg %p71
        $region22: #{proto_matcher.1} parent=15 // pred_check_branch
          %149 = sbr.rel (%p147) target = $region24
        $region23: #{proto_matcher.1} parent=15 // pred_region
          %p150 = scmp.lt.s32.totalorder %s18, 1
          %s151 = scalar_select %p150, %s18, 1
          %s152 = scalar_lea.vmem %s1, %s151
        $region24: #{proto_matcher.1} parent=15 // pred_fallthru
          _
      $region16: #{proto_matcher.1} parent=5 // pred_fallthru
        _
      %p153 = scmp.le.s32.totalorder 1, %s11
      %p154 = scmp.lt.s32.totalorder %s11, 3
      %p155 = pnand %p153, %p154
      %p156 = pneg %p155
      // Predicated region
      $region25: #{proto_matcher.1} parent=5 // pred_check
        _
      $region26: #{proto_matcher.1} parent=5 // pred_check_branch
        %158 = sbr.rel (%p155) target = $region28
      $region27: #{proto_matcher.1} parent=5 // pred_region
        %s159 = ssub.s32 %s11, 1
        %s160 = sand.u32 %s38, 1
        %s161 = scalar_lea.sflag [#allocation3], %s160
        %s162 = sand.u32 %s38, 1
        %s163 = smul.addr %s162, 256
        %s164 = scalar_lea.vmem [#allocation2], %s163
        // Predicated region
        $region29: #{proto_matcher.1} parent=27 // pred_check
          %p165 = pneg %p51
        $region30: #{proto_matcher.1} parent=27 // pred_check_branch
          %167 = sbr.rel (%p165) target = $region32
        $region31: #{proto_matcher.1} parent=27 // pred_region
          %168 = dma.done %s161, 4096
        $region32: #{proto_matcher.1} parent=27 // pred_fallthru
          _
        %s169 = sand.u32 %s38, 1
        %s170 = scalar_lea.sflag [#allocation3], %s169
        %s171 = sand.u32 %s38, 1
        %s172 = smul.addr %s171, 256
        %s173 = scalar_lea.vmem [#allocation2], %s172
        %p174 = pneg %p51
        %p175 = pneg %p48
        %p176 = scmp.lt.s32.totalorder %s20, 1
        %s177 = scalar_select %p176, %s20, 1
        %s178 = scalar_lea.vmem %s1, %s177
        %p179 = pneg %p77
        %p180 = pneg %p74
        %p181 = pneg %p105
        %p182 = pneg %p102
        %s183 = smul.u32 2, %s21
        %p184 = scmp.lt.s32.totalorder %s20, 1
        %s185 = scalar_select %p184, %s20, 1
        %p186 = scmp.lt.s32.totalorder %s183, 1
        %s187 = scalar_select %p186, %s183, 1
        %s188 = smul.addr %s185, 2
        %s189 = sadd.s32 %s187, %s188
        %s190 = scalar_lea.vmem %s2, %s189
        %s191 = smul.u32 32, %s21
        %p192 = scmp.lt.s32.totalorder %s20, 1
        %s193 = scalar_select %p192, %s20, 1
        %s194 = scalar_lea.vmem %s1, %s193
        %s195 = smul.u32 2, %s21
        %p196 = scmp.lt.s32.totalorder %s20, 1
        %s197 = scalar_select %p196, %s20, 1
        %p198 = scmp.lt.s32.totalorder %s195, 1
        %s199 = scalar_select %p198, %s195, 1
        %s200 = smul.addr %s197, 2
        %s201 = sadd.s32 %s199, %s200
        %s202 = scalar_lea.vmem %s2, %s201
        %s203 = smul.u32 2, %s21
        %v204 = vld [vmem:[%s164] sm:$0xff]
        %v205 = vld [vmem:[%s164 + $0x8] sm:$0xff]
        %v206 = vld [vmem:[%s164 + $0x10] sm:$0xff]
        %v207 = vld [vmem:[%s164 + $0x18] sm:$0xff]
        %v208 = vld [vmem:[%s164 + $0x20] sm:$0xff]
        %v209 = vld [vmem:[%s164 + $0x28] sm:$0xff]
        %v210 = vld [vmem:[%s164 + $0x30] sm:$0xff]
        %v211 = vld [vmem:[%s164 + $0x38] sm:$0xff]
        %v212 = vld [vmem:[%s164 + $0x40] sm:$0xff]
        %v213 = vld [vmem:[%s164 + $0x48] sm:$0xff]
        %v214 = vld [vmem:[%s164 + $0x50] sm:$0xff]
        %v215 = vld [vmem:[%s164 + $0x58] sm:$0xff]
        %v216 = vld [vmem:[%s164 + $0x60] sm:$0xff]
        %v217 = vld [vmem:[%s164 + $0x68] sm:$0xff]
        %v218 = vld [vmem:[%s164 + $0x70] sm:$0xff]
        %v219 = vld [vmem:[%s164 + $0x78] sm:$0xff]
        %v220 = vld [vmem:[%s164 + $0x80] sm:$0xff]
        %v221 = vld [vmem:[%s164 + $0x88] sm:$0xff]
        %v222 = vld [vmem:[%s164 + $0x90] sm:$0xff]
        %v223 = vld [vmem:[%s164 + $0x98] sm:$0xff]
        %v224 = vld [vmem:[%s164 + $0xa0] sm:$0xff]
        %v225 = vld [vmem:[%s164 + $0xa8] sm:$0xff]
        %v226 = vld [vmem:[%s164 + $0xb0] sm:$0xff]
        %v227 = vld [vmem:[%s164 + $0xb8] sm:$0xff]
        %v228 = vld [vmem:[%s164 + $0xc0] sm:$0xff]
        %v229 = vld [vmem:[%s164 + $0xc8] sm:$0xff]
        %v230 = vld [vmem:[%s164 + $0xd0] sm:$0xff]
        %v231 = vld [vmem:[%s164 + $0xd8] sm:$0xff]
        %v232 = vld [vmem:[%s164 + $0xe0] sm:$0xff]
        %v233 = vld [vmem:[%s164 + $0xe8] sm:$0xff]
        %v234 = vld [vmem:[%s164 + $0xf0] sm:$0xff]
        %v235 = vld [vmem:[%s164 + $0xf8] sm:$0xff]
        %v236 = vld [vmem:[%s194] sm:$0x1]
        %v238 = vlaneseq
        %v239 = vshrl.u32 %v238, 7
        %v240 = vsub.s32 0, %v239
        %v241 = vrot.slane %v236, %v240
        %v243 = vsub.f32 %v204, %v241
        %v244 = vsub.f32 %v205, %v241
        %v245 = vsub.f32 %v206, %v241
        %v246 = vsub.f32 %v207, %v241
        %v247 = vsub.f32 %v208, %v241
        %v248 = vsub.f32 %v209, %v241
        %v249 = vsub.f32 %v210, %v241
        %v250 = vsub.f32 %v211, %v241
        %v251 = vsub.f32 %v212, %v241
        %v252 = vsub.f32 %v213, %v241
        %v253 = vsub.f32 %v214, %v241
        %v254 = vsub.f32 %v215, %v241
        %v255 = vsub.f32 %v216, %v241
        %v256 = vsub.f32 %v217, %v241
        %v257 = vsub.f32 %v218, %v241
        %v258 = vsub.f32 %v219, %v241
        %v259 = vsub.f32 %v220, %v241
        %v260 = vsub.f32 %v221, %v241
        %v261 = vsub.f32 %v222, %v241
        %v262 = vsub.f32 %v223, %v241
        %v263 = vsub.f32 %v224, %v241
        %v264 = vsub.f32 %v225, %v241
        %v265 = vsub.f32 %v226, %v241
        %v266 = vsub.f32 %v227, %v241
        %v267 = vsub.f32 %v228, %v241
        %v268 = vsub.f32 %v229, %v241
        %v269 = vsub.f32 %v230, %v241
        %v270 = vsub.f32 %v231, %v241
        %v271 = vsub.f32 %v232, %v241
        %v272 = vsub.f32 %v233, %v241
        %v273 = vsub.f32 %v234, %v241
        %v274 = vsub.f32 %v235, %v241
        %v275 = vmul.f32 %v243, %v243
        %v276 = vmul.f32 %v244, %v244
        %v277 = vmul.f32 %v245, %v245
        %v278 = vmul.f32 %v246, %v246
        %v279 = vmul.f32 %v247, %v247
        %v280 = vmul.f32 %v248, %v248
        %v281 = vmul.f32 %v249, %v249
        %v282 = vmul.f32 %v250, %v250
        %v283 = vmul.f32 %v251, %v251
        %v284 = vmul.f32 %v252, %v252
        %v285 = vmul.f32 %v253, %v253
        %v286 = vmul.f32 %v254, %v254
        %v287 = vmul.f32 %v255, %v255
        %v288 = vmul.f32 %v256, %v256
        %v289 = vmul.f32 %v257, %v257
        %v290 = vmul.f32 %v258, %v258
        %v291 = vmul.f32 %v259, %v259
        %v292 = vmul.f32 %v260, %v260
        %v293 = vmul.f32 %v261, %v261
        %v294 = vmul.f32 %v262, %v262
        %v295 = vmul.f32 %v263, %v263
        %v296 = vmul.f32 %v264, %v264
        %v297 = vmul.f32 %v265, %v265
        %v298 = vmul.f32 %v266, %v266
        %v299 = vmul.f32 %v267, %v267
        %v300 = vmul.f32 %v268, %v268
        %v301 = vmul.f32 %v269, %v269
        %v302 = vmul.f32 %v270, %v270
        %v303 = vmul.f32 %v271, %v271
        %v304 = vmul.f32 %v272, %v272
        %v305 = vmul.f32 %v273, %v273
        %v306 = vmul.f32 %v274, %v274
        %307 = vadd.xlane.f32.xlu0 %v275
        %v308 = vpop.xlane.xlu0 %307
        %309 = vadd.xlane.f32.xlu0 %v276
        %v310 = vpop.xlane.xlu0 %309
        %311 = vadd.xlane.f32.xlu0 %v277
        %v312 = vpop.xlane.xlu0 %311
        %313 = vadd.xlane.f32.xlu0 %v278
        %v314 = vpop.xlane.xlu0 %313
        %315 = vadd.xlane.f32.xlu0 %v279
        %v316 = vpop.xlane.xlu0 %315
        %317 = vadd.xlane.f32.xlu0 %v280
        %v318 = vpop.xlane.xlu0 %317
        %319 = vadd.xlane.f32.xlu0 %v281
        %v320 = vpop.xlane.xlu0 %319
        %321 = vadd.xlane.f32.xlu0 %v282
        %v322 = vpop.xlane.xlu0 %321
        %323 = vadd.xlane.f32.xlu0 %v283
        %v324 = vpop.xlane.xlu0 %323
        %325 = vadd.xlane.f32.xlu0 %v284
        %v326 = vpop.xlane.xlu0 %325
        %327 = vadd.xlane.f32.xlu0 %v285
        %v328 = vpop.xlane.xlu0 %327
        %329 = vadd.xlane.f32.xlu0 %v286
        %v330 = vpop.xlane.xlu0 %329
        %331 = vadd.xlane.f32.xlu0 %v287
        %v332 = vpop.xlane.xlu0 %331
        %333 = vadd.xlane.f32.xlu0 %v288
        %v334 = vpop.xlane.xlu0 %333
        %335 = vadd.xlane.f32.xlu0 %v289
        %v336 = vpop.xlane.xlu0 %335
        %337 = vadd.xlane.f32.xlu0 %v290
        %v338 = vpop.xlane.xlu0 %337
        %339 = vadd.xlane.f32.xlu0 %v291
        %v340 = vpop.xlane.xlu0 %339
        %341 = vadd.xlane.f32.xlu0 %v292
        %v342 = vpop.xlane.xlu0 %341
        %343 = vadd.xlane.f32.xlu0 %v293
        %v344 = vpop.xlane.xlu0 %343
        %345 = vadd.xlane.f32.xlu0 %v294
        %v346 = vpop.xlane.xlu0 %345
        %347 = vadd.xlane.f32.xlu0 %v295
        %v348 = vpop.xlane.xlu0 %347
        %349 = vadd.xlane.f32.xlu0 %v296
        %v350 = vpop.xlane.xlu0 %349
        %351 = vadd.xlane.f32.xlu0 %v297
        %v352 = vpop.xlane.xlu0 %351
        %353 = vadd.xlane.f32.xlu0 %v298
        %v354 = vpop.xlane.xlu0 %353
        %355 = vadd.xlane.f32.xlu0 %v299
        %v356 = vpop.xlane.xlu0 %355
        %357 = vadd.xlane.f32.xlu0 %v300
        %v358 = vpop.xlane.xlu0 %357
        %359 = vadd.xlane.f32.xlu0 %v301
        %v360 = vpop.xlane.xlu0 %359
        %361 = vadd.xlane.f32.xlu0 %v302
        %v362 = vpop.xlane.xlu0 %361
        %363 = vadd.xlane.f32.xlu0 %v303
        %v364 = vpop.xlane.xlu0 %363
        %365 = vadd.xlane.f32.xlu0 %v304
        %v366 = vpop.xlane.xlu0 %365
        %367 = vadd.xlane.f32.xlu0 %v305
        %v368 = vpop.xlane.xlu0 %367
        %369 = vadd.xlane.f32.xlu0 %v306
        %v370 = vpop.xlane.xlu0 %369
        %v371 = vrsqrt.pop %v308
        %v372 = vmul.f32 %v308, %v371
        %vm373 = vcmp.eq.f32.partialorder %v308, inf
        %v374 = vsel %vm373, %v308, %v372
        %vm375 = vcmp.eq.f32.partialorder %v308, 0.0
        %v376 = vand.u32 %v308, 2147483648
        %v377 = vsel %vm375, %v376, %v374
        %v378 = vrsqrt.pop %v310
        %v379 = vmul.f32 %v310, %v378
        %vm380 = vcmp.eq.f32.partialorder %v310, inf
        %v381 = vsel %vm380, %v310, %v379
        %vm382 = vcmp.eq.f32.partialorder %v310, 0.0
        %v383 = vand.u32 %v310, 2147483648
        %v384 = vsel %vm382, %v383, %v381
        %v385 = vrsqrt.pop %v312
        %v386 = vmul.f32 %v312, %v385
        %vm387 = vcmp.eq.f32.partialorder %v312, inf
        %v388 = vsel %vm387, %v312, %v386
        %vm389 = vcmp.eq.f32.partialorder %v312, 0.0
        %v390 = vand.u32 %v312, 2147483648
        %v391 = vsel %vm389, %v390, %v388
        %v392 = vrsqrt.pop %v314
        %v393 = vmul.f32 %v314, %v392
        %vm394 = vcmp.eq.f32.partialorder %v314, inf
        %v395 = vsel %vm394, %v314, %v393
        %vm396 = vcmp.eq.f32.partialorder %v314, 0.0
        %v397 = vand.u32 %v314, 2147483648
        %v398 = vsel %vm396, %v397, %v395
        %v399 = vrsqrt.pop %v316
        %v400 = vmul.f32 %v316, %v399
        %vm401 = vcmp.eq.f32.partialorder %v316, inf
        %v402 = vsel %vm401, %v316, %v400
        %vm403 = vcmp.eq.f32.partialorder %v316, 0.0
        %v404 = vand.u32 %v316, 2147483648
        %v405 = vsel %vm403, %v404, %v402
        %v406 = vrsqrt.pop %v318
        %v407 = vmul.f32 %v318, %v406
        %vm408 = vcmp.eq.f32.partialorder %v318, inf
        %v409 = vsel %vm408, %v318, %v407
        %vm410 = vcmp.eq.f32.partialorder %v318, 0.0
        %v411 = vand.u32 %v318, 2147483648
        %v412 = vsel %vm410, %v411, %v409
        %v413 = vrsqrt.pop %v320
        %v414 = vmul.f32 %v320, %v413
        %vm415 = vcmp.eq.f32.partialorder %v320, inf
        %v416 = vsel %vm415, %v320, %v414
        %vm417 = vcmp.eq.f32.partialorder %v320, 0.0
        %v418 = vand.u32 %v320, 2147483648
        %v419 = vsel %vm417, %v418, %v416
        %v420 = vrsqrt.pop %v322
        %v421 = vmul.f32 %v322, %v420
        %vm422 = vcmp.eq.f32.partialorder %v322, inf
        %v423 = vsel %vm422, %v322, %v421
        %vm424 = vcmp.eq.f32.partialorder %v322, 0.0
        %v425 = vand.u32 %v322, 2147483648
        %v426 = vsel %vm424, %v425, %v423
        %v427 = vrsqrt.pop %v324
        %v428 = vmul.f32 %v324, %v427
        %vm429 = vcmp.eq.f32.partialorder %v324, inf
        %v430 = vsel %vm429, %v324, %v428
        %vm431 = vcmp.eq.f32.partialorder %v324, 0.0
        %v432 = vand.u32 %v324, 2147483648
        %v433 = vsel %vm431, %v432, %v430
        %v434 = vrsqrt.pop %v326
        %v435 = vmul.f32 %v326, %v434
        %vm436 = vcmp.eq.f32.partialorder %v326, inf
        %v437 = vsel %vm436, %v326, %v435
        %vm438 = vcmp.eq.f32.partialorder %v326, 0.0
        %v439 = vand.u32 %v326, 2147483648
        %v440 = vsel %vm438, %v439, %v437
        %v441 = vrsqrt.pop %v328
        %v442 = vmul.f32 %v328, %v441
        %vm443 = vcmp.eq.f32.partialorder %v328, inf
        %v444 = vsel %vm443, %v328, %v442
        %vm445 = vcmp.eq.f32.partialorder %v328, 0.0
        %v446 = vand.u32 %v328, 2147483648
        %v447 = vsel %vm445, %v446, %v444
        %v448 = vrsqrt.pop %v330
        %v449 = vmul.f32 %v330, %v448
        %vm450 = vcmp.eq.f32.partialorder %v330, inf
        %v451 = vsel %vm450, %v330, %v449
        %vm452 = vcmp.eq.f32.partialorder %v330, 0.0
        %v453 = vand.u32 %v330, 2147483648
        %v454 = vsel %vm452, %v453, %v451
        %v455 = vrsqrt.pop %v332
        %v456 = vmul.f32 %v332, %v455
        %vm457 = vcmp.eq.f32.partialorder %v332, inf
        %v458 = vsel %vm457, %v332, %v456
        %vm459 = vcmp.eq.f32.partialorder %v332, 0.0
        %v460 = vand.u32 %v332, 2147483648
        %v461 = vsel %vm459, %v460, %v458
        %v462 = vrsqrt.pop %v334
        %v463 = vmul.f32 %v334, %v462
        %vm464 = vcmp.eq.f32.partialorder %v334, inf
        %v465 = vsel %vm464, %v334, %v463
        %vm466 = vcmp.eq.f32.partialorder %v334, 0.0
        %v467 = vand.u32 %v334, 2147483648
        %v468 = vsel %vm466, %v467, %v465
        %v469 = vrsqrt.pop %v336
        %v470 = vmul.f32 %v336, %v469
        %vm471 = vcmp.eq.f32.partialorder %v336, inf
        %v472 = vsel %vm471, %v336, %v470
        %vm473 = vcmp.eq.f32.partialorder %v336, 0.0
        %v474 = vand.u32 %v336, 2147483648
        %v475 = vsel %vm473, %v474, %v472
        %v476 = vrsqrt.pop %v338
        %v477 = vmul.f32 %v338, %v476
        %vm478 = vcmp.eq.f32.partialorder %v338, inf
        %v479 = vsel %vm478, %v338, %v477
        %vm480 = vcmp.eq.f32.partialorder %v338, 0.0
        %v481 = vand.u32 %v338, 2147483648
        %v482 = vsel %vm480, %v481, %v479
        %v483 = vrsqrt.pop %v340
        %v484 = vmul.f32 %v340, %v483
        %vm485 = vcmp.eq.f32.partialorder %v340, inf
        %v486 = vsel %vm485, %v340, %v484
        %vm487 = vcmp.eq.f32.partialorder %v340, 0.0
        %v488 = vand.u32 %v340, 2147483648
        %v489 = vsel %vm487, %v488, %v486
        %v490 = vrsqrt.pop %v342
        %v491 = vmul.f32 %v342, %v490
        %vm492 = vcmp.eq.f32.partialorder %v342, inf
        %v493 = vsel %vm492, %v342, %v491
        %vm494 = vcmp.eq.f32.partialorder %v342, 0.0
        %v495 = vand.u32 %v342, 2147483648
        %v496 = vsel %vm494, %v495, %v493
        %v497 = vrsqrt.pop %v344
        %v498 = vmul.f32 %v344, %v497
        %vm499 = vcmp.eq.f32.partialorder %v344, inf
        %v500 = vsel %vm499, %v344, %v498
        %vm501 = vcmp.eq.f32.partialorder %v344, 0.0
        %v502 = vand.u32 %v344, 2147483648
        %v503 = vsel %vm501, %v502, %v500
        %v504 = vrsqrt.pop %v346
        %v505 = vmul.f32 %v346, %v504
        %vm506 = vcmp.eq.f32.partialorder %v346, inf
        %v507 = vsel %vm506, %v346, %v505
        %vm508 = vcmp.eq.f32.partialorder %v346, 0.0
        %v509 = vand.u32 %v346, 2147483648
        %v510 = vsel %vm508, %v509, %v507
        %v511 = vrsqrt.pop %v348
        %v512 = vmul.f32 %v348, %v511
        %vm513 = vcmp.eq.f32.partialorder %v348, inf
        %v514 = vsel %vm513, %v348, %v512
        %vm515 = vcmp.eq.f32.partialorder %v348, 0.0
        %v516 = vand.u32 %v348, 2147483648
        %v517 = vsel %vm515, %v516, %v514
        %v518 = vrsqrt.pop %v350
        %v519 = vmul.f32 %v350, %v518
        %vm520 = vcmp.eq.f32.partialorder %v350, inf
        %v521 = vsel %vm520, %v350, %v519
        %vm522 = vcmp.eq.f32.partialorder %v350, 0.0
        %v523 = vand.u32 %v350, 2147483648
        %v524 = vsel %vm522, %v523, %v521
        %v525 = vrsqrt.pop %v352
        %v526 = vmul.f32 %v352, %v525
        %vm527 = vcmp.eq.f32.partialorder %v352, inf
        %v528 = vsel %vm527, %v352, %v526
        %vm529 = vcmp.eq.f32.partialorder %v352, 0.0
        %v530 = vand.u32 %v352, 2147483648
        %v531 = vsel %vm529, %v530, %v528
        %v532 = vrsqrt.pop %v354
        %v533 = vmul.f32 %v354, %v532
        %vm534 = vcmp.eq.f32.partialorder %v354, inf
        %v535 = vsel %vm534, %v354, %v533
        %vm536 = vcmp.eq.f32.partialorder %v354, 0.0
        %v537 = vand.u32 %v354, 2147483648
        %v538 = vsel %vm536, %v537, %v535
        %v539 = vrsqrt.pop %v356
        %v540 = vmul.f32 %v356, %v539
        %vm541 = vcmp.eq.f32.partialorder %v356, inf
        %v542 = vsel %vm541, %v356, %v540
        %vm543 = vcmp.eq.f32.partialorder %v356, 0.0
        %v544 = vand.u32 %v356, 2147483648
        %v545 = vsel %vm543, %v544, %v542
        %v546 = vrsqrt.pop %v358
        %v547 = vmul.f32 %v358, %v546
        %vm548 = vcmp.eq.f32.partialorder %v358, inf
        %v549 = vsel %vm548, %v358, %v547
        %vm550 = vcmp.eq.f32.partialorder %v358, 0.0
        %v551 = vand.u32 %v358, 2147483648
        %v552 = vsel %vm550, %v551, %v549
        %v553 = vrsqrt.pop %v360
        %v554 = vmul.f32 %v360, %v553
        %vm555 = vcmp.eq.f32.partialorder %v360, inf
        %v556 = vsel %vm555, %v360, %v554
        %vm557 = vcmp.eq.f32.partialorder %v360, 0.0
        %v558 = vand.u32 %v360, 2147483648
        %v559 = vsel %vm557, %v558, %v556
        %v560 = vrsqrt.pop %v362
        %v561 = vmul.f32 %v362, %v560
        %vm562 = vcmp.eq.f32.partialorder %v362, inf
        %v563 = vsel %vm562, %v362, %v561
        %vm564 = vcmp.eq.f32.partialorder %v362, 0.0
        %v565 = vand.u32 %v362, 2147483648
        %v566 = vsel %vm564, %v565, %v563
        %v567 = vrsqrt.pop %v364
        %v568 = vmul.f32 %v364, %v567
        %vm569 = vcmp.eq.f32.partialorder %v364, inf
        %v570 = vsel %vm569, %v364, %v568
        %vm571 = vcmp.eq.f32.partialorder %v364, 0.0
        %v572 = vand.u32 %v364, 2147483648
        %v573 = vsel %vm571, %v572, %v570
        %v574 = vrsqrt.pop %v366
        %v575 = vmul.f32 %v366, %v574
        %vm576 = vcmp.eq.f32.partialorder %v366, inf
        %v577 = vsel %vm576, %v366, %v575
        %vm578 = vcmp.eq.f32.partialorder %v366, 0.0
        %v579 = vand.u32 %v366, 2147483648
        %v580 = vsel %vm578, %v579, %v577
        %v581 = vrsqrt.pop %v368
        %v582 = vmul.f32 %v368, %v581
        %vm583 = vcmp.eq.f32.partialorder %v368, inf
        %v584 = vsel %vm583, %v368, %v582
        %vm585 = vcmp.eq.f32.partialorder %v368, 0.0
        %v586 = vand.u32 %v368, 2147483648
        %v587 = vsel %vm585, %v586, %v584
        %v588 = vrsqrt.pop %v370
        %v589 = vmul.f32 %v370, %v588
        %vm590 = vcmp.eq.f32.partialorder %v370, inf
        %v591 = vsel %vm590, %v370, %v589
        %vm592 = vcmp.eq.f32.partialorder %v370, 0.0
        %v593 = vand.u32 %v370, 2147483648
        %v594 = vsel %vm592, %v593, %v591
        %v595 = vsub.f32 0.0, %v377
        %v596 = vsub.f32 0.0, %v384
        %v597 = vsub.f32 0.0, %v391
        %v598 = vsub.f32 0.0, %v398
        %v599 = vsub.f32 0.0, %v405
        %v600 = vsub.f32 0.0, %v412
        %v601 = vsub.f32 0.0, %v419
        %v602 = vsub.f32 0.0, %v426
        %v603 = vsub.f32 0.0, %v433
        %v604 = vsub.f32 0.0, %v440
        %v605 = vsub.f32 0.0, %v447
        %v606 = vsub.f32 0.0, %v454
        %v607 = vsub.f32 0.0, %v461
        %v608 = vsub.f32 0.0, %v468
        %v609 = vsub.f32 0.0, %v475
        %v610 = vsub.f32 0.0, %v482
        %v611 = vsub.f32 0.0, %v489
        %v612 = vsub.f32 0.0, %v496
        %v613 = vsub.f32 0.0, %v503
        %v614 = vsub.f32 0.0, %v510
        %v615 = vsub.f32 0.0, %v517
        %v616 = vsub.f32 0.0, %v524
        %v617 = vsub.f32 0.0, %v531
        %v618 = vsub.f32 0.0, %v538
        %v619 = vsub.f32 0.0, %v545
        %v620 = vsub.f32 0.0, %v552
        %v621 = vsub.f32 0.0, %v559
        %v622 = vsub.f32 0.0, %v566
        %v623 = vsub.f32 0.0, %v573
        %v624 = vsub.f32 0.0, %v580
        %v625 = vsub.f32 0.0, %v587
        %v626 = vsub.f32 0.0, %v594
        %v659 = vlaneseq
        %v660 = vshrl.u32 %v659, 7
        %v661 = vsub.s32 0, %v660
        %v662 = vrot.slane %v595, %v661
        %v663 = vlaneseq
        %v664 = vshrl.u32 %v663, 7
        %v665 = vsub.s32 1, %v664
        %v666 = vrot.slane %v595, %v665
        %v667 = vlaneseq
        %v668 = vshrl.u32 %v667, 7
        %v669 = vsub.s32 2, %v668
        %v670 = vrot.slane %v595, %v669
        %v671 = vlaneseq
        %v672 = vshrl.u32 %v671, 7
        %v673 = vsub.s32 3, %v672
        %v674 = vrot.slane %v595, %v673
        %v675 = vlaneseq
        %v676 = vshrl.u32 %v675, 7
        %v677 = vsub.s32 4, %v676
        %v678 = vrot.slane %v595, %v677
        %v679 = vlaneseq
        %v680 = vshrl.u32 %v679, 7
        %v681 = vsub.s32 5, %v680
        %v682 = vrot.slane %v595, %v681
        %v683 = vlaneseq
        %v684 = vshrl.u32 %v683, 7
        %v685 = vsub.s32 6, %v684
        %v686 = vrot.slane %v595, %v685
        %v687 = vlaneseq
        %v688 = vshrl.u32 %v687, 7
        %v689 = vsub.s32 7, %v688
        %v690 = vrot.slane %v595, %v689
        %v691 = vlaneseq
        %v692 = vshrl.u32 %v691, 7
        %v693 = vsub.s32 0, %v692
        %v694 = vrot.slane %v596, %v693
        %v695 = vlaneseq
        %v696 = vshrl.u32 %v695, 7
        %v697 = vsub.s32 1, %v696
        %v698 = vrot.slane %v596, %v697
        %v699 = vlaneseq
        %v700 = vshrl.u32 %v699, 7
        %v701 = vsub.s32 2, %v700
        %v702 = vrot.slane %v596, %v701
        %v703 = vlaneseq
        %v704 = vshrl.u32 %v703, 7
        %v705 = vsub.s32 3, %v704
        %v706 = vrot.slane %v596, %v705
        %v707 = vlaneseq
        %v708 = vshrl.u32 %v707, 7
        %v709 = vsub.s32 4, %v708
        %v710 = vrot.slane %v596, %v709
        %v711 = vlaneseq
        %v712 = vshrl.u32 %v711, 7
        %v713 = vsub.s32 5, %v712
        %v714 = vrot.slane %v596, %v713
        %v715 = vlaneseq
        %v716 = vshrl.u32 %v715, 7
        %v717 = vsub.s32 6, %v716
        %v718 = vrot.slane %v596, %v717
        %v719 = vlaneseq
        %v720 = vshrl.u32 %v719, 7
        %v721 = vsub.s32 7, %v720
        %v722 = vrot.slane %v596, %v721
        %v723 = vlaneseq
        %v724 = vshrl.u32 %v723, 7
        %v725 = vsub.s32 0, %v724
        %v726 = vrot.slane %v597, %v725
        %v727 = vlaneseq
        %v728 = vshrl.u32 %v727, 7
        %v729 = vsub.s32 1, %v728
        %v730 = vrot.slane %v597, %v729
        %v731 = vlaneseq
        %v732 = vshrl.u32 %v731, 7
        %v733 = vsub.s32 2, %v732
        %v734 = vrot.slane %v597, %v733
        %v735 = vlaneseq
        %v736 = vshrl.u32 %v735, 7
        %v737 = vsub.s32 3, %v736
        %v738 = vrot.slane %v597, %v737
        %v739 = vlaneseq
        %v740 = vshrl.u32 %v739, 7
        %v741 = vsub.s32 4, %v740
        %v742 = vrot.slane %v597, %v741
        %v743 = vlaneseq
        %v744 = vshrl.u32 %v743, 7
        %v745 = vsub.s32 5, %v744
        %v746 = vrot.slane %v597, %v745
        %v747 = vlaneseq
        %v748 = vshrl.u32 %v747, 7
        %v749 = vsub.s32 6, %v748
        %v750 = vrot.slane %v597, %v749
        %v751 = vlaneseq
        %v752 = vshrl.u32 %v751, 7
        %v753 = vsub.s32 7, %v752
        %v754 = vrot.slane %v597, %v753
        %v755 = vlaneseq
        %v756 = vshrl.u32 %v755, 7
        %v757 = vsub.s32 0, %v756
        %v758 = vrot.slane %v598, %v757
        %v759 = vlaneseq
        %v760 = vshrl.u32 %v759, 7
        %v761 = vsub.s32 1, %v760
        %v762 = vrot.slane %v598, %v761
        %v763 = vlaneseq
        %v764 = vshrl.u32 %v763, 7
        %v765 = vsub.s32 2, %v764
        %v766 = vrot.slane %v598, %v765
        %v767 = vlaneseq
        %v768 = vshrl.u32 %v767, 7
        %v769 = vsub.s32 3, %v768
        %v770 = vrot.slane %v598, %v769
        %v771 = vlaneseq
        %v772 = vshrl.u32 %v771, 7
        %v773 = vsub.s32 4, %v772
        %v774 = vrot.slane %v598, %v773
        %v775 = vlaneseq
        %v776 = vshrl.u32 %v775, 7
        %v777 = vsub.s32 5, %v776
        %v778 = vrot.slane %v598, %v777
        %v779 = vlaneseq
        %v780 = vshrl.u32 %v779, 7
        %v781 = vsub.s32 6, %v780
        %v782 = vrot.slane %v598, %v781
        %v783 = vlaneseq
        %v784 = vshrl.u32 %v783, 7
        %v785 = vsub.s32 7, %v784
        %v786 = vrot.slane %v598, %v785
        %v787 = vlaneseq
        %v788 = vshrl.u32 %v787, 7
        %v789 = vsub.s32 0, %v788
        %v790 = vrot.slane %v599, %v789
        %v791 = vlaneseq
        %v792 = vshrl.u32 %v791, 7
        %v793 = vsub.s32 1, %v792
        %v794 = vrot.slane %v599, %v793
        %v795 = vlaneseq
        %v796 = vshrl.u32 %v795, 7
        %v797 = vsub.s32 2, %v796
        %v798 = vrot.slane %v599, %v797
        %v799 = vlaneseq
        %v800 = vshrl.u32 %v799, 7
        %v801 = vsub.s32 3, %v800
        %v802 = vrot.slane %v599, %v801
        %v803 = vlaneseq
        %v804 = vshrl.u32 %v803, 7
        %v805 = vsub.s32 4, %v804
        %v806 = vrot.slane %v599, %v805
        %v807 = vlaneseq
        %v808 = vshrl.u32 %v807, 7
        %v809 = vsub.s32 5, %v808
        %v810 = vrot.slane %v599, %v809
        %v811 = vlaneseq
        %v812 = vshrl.u32 %v811, 7
        %v813 = vsub.s32 6, %v812
        %v814 = vrot.slane %v599, %v813
        %v815 = vlaneseq
        %v816 = vshrl.u32 %v815, 7
        %v817 = vsub.s32 7, %v816
        %v818 = vrot.slane %v599, %v817
        %v819 = vlaneseq
        %v820 = vshrl.u32 %v819, 7
        %v821 = vsub.s32 0, %v820
        %v822 = vrot.slane %v600, %v821
        %v823 = vlaneseq
        %v824 = vshrl.u32 %v823, 7
        %v825 = vsub.s32 1, %v824
        %v826 = vrot.slane %v600, %v825
        %v827 = vlaneseq
        %v828 = vshrl.u32 %v827, 7
        %v829 = vsub.s32 2, %v828
        %v830 = vrot.slane %v600, %v829
        %v831 = vlaneseq
        %v832 = vshrl.u32 %v831, 7
        %v833 = vsub.s32 3, %v832
        %v834 = vrot.slane %v600, %v833
        %v835 = vlaneseq
        %v836 = vshrl.u32 %v835, 7
        %v837 = vsub.s32 4, %v836
        %v838 = vrot.slane %v600, %v837
        %v839 = vlaneseq
        %v840 = vshrl.u32 %v839, 7
        %v841 = vsub.s32 5, %v840
        %v842 = vrot.slane %v600, %v841
        %v843 = vlaneseq
        %v844 = vshrl.u32 %v843, 7
        %v845 = vsub.s32 6, %v844
        %v846 = vrot.slane %v600, %v845
        %v847 = vlaneseq
        %v848 = vshrl.u32 %v847, 7
        %v849 = vsub.s32 7, %v848
        %v850 = vrot.slane %v600, %v849
        %v851 = vlaneseq
        %v852 = vshrl.u32 %v851, 7
        %v853 = vsub.s32 0, %v852
        %v854 = vrot.slane %v601, %v853
        %v855 = vlaneseq
        %v856 = vshrl.u32 %v855, 7
        %v857 = vsub.s32 1, %v856
        %v858 = vrot.slane %v601, %v857
        %v859 = vlaneseq
        %v860 = vshrl.u32 %v859, 7
        %v861 = vsub.s32 2, %v860
        %v862 = vrot.slane %v601, %v861
        %v863 = vlaneseq
        %v864 = vshrl.u32 %v863, 7
        %v865 = vsub.s32 3, %v864
        %v866 = vrot.slane %v601, %v865
        %v867 = vlaneseq
        %v868 = vshrl.u32 %v867, 7
        %v869 = vsub.s32 4, %v868
        %v870 = vrot.slane %v601, %v869
        %v871 = vlaneseq
        %v872 = vshrl.u32 %v871, 7
        %v873 = vsub.s32 5, %v872
        %v874 = vrot.slane %v601, %v873
        %v875 = vlaneseq
        %v876 = vshrl.u32 %v875, 7
        %v877 = vsub.s32 6, %v876
        %v878 = vrot.slane %v601, %v877
        %v879 = vlaneseq
        %v880 = vshrl.u32 %v879, 7
        %v881 = vsub.s32 7, %v880
        %v882 = vrot.slane %v601, %v881
        %v883 = vlaneseq
        %v884 = vshrl.u32 %v883, 7
        %v885 = vsub.s32 0, %v884
        %v886 = vrot.slane %v602, %v885
        %v887 = vlaneseq
        %v888 = vshrl.u32 %v887, 7
        %v889 = vsub.s32 1, %v888
        %v890 = vrot.slane %v602, %v889
        %v891 = vlaneseq
        %v892 = vshrl.u32 %v891, 7
        %v893 = vsub.s32 2, %v892
        %v894 = vrot.slane %v602, %v893
        %v895 = vlaneseq
        %v896 = vshrl.u32 %v895, 7
        %v897 = vsub.s32 3, %v896
        %v898 = vrot.slane %v602, %v897
        %v899 = vlaneseq
        %v900 = vshrl.u32 %v899, 7
        %v901 = vsub.s32 4, %v900
        %v902 = vrot.slane %v602, %v901
        %v903 = vlaneseq
        %v904 = vshrl.u32 %v903, 7
        %v905 = vsub.s32 5, %v904
        %v906 = vrot.slane %v602, %v905
        %v907 = vlaneseq
        %v908 = vshrl.u32 %v907, 7
        %v909 = vsub.s32 6, %v908
        %v910 = vrot.slane %v602, %v909
        %v911 = vlaneseq
        %v912 = vshrl.u32 %v911, 7
        %v913 = vsub.s32 7, %v912
        %v914 = vrot.slane %v602, %v913
        %v915 = vlaneseq
        %v916 = vshrl.u32 %v915, 7
        %v917 = vsub.s32 0, %v916
        %v918 = vrot.slane %v603, %v917
        %v919 = vlaneseq
        %v920 = vshrl.u32 %v919, 7
        %v921 = vsub.s32 1, %v920
        %v922 = vrot.slane %v603, %v921
        %v923 = vlaneseq
        %v924 = vshrl.u32 %v923, 7
        %v925 = vsub.s32 2, %v924
        %v926 = vrot.slane %v603, %v925
        %v927 = vlaneseq
        %v928 = vshrl.u32 %v927, 7
        %v929 = vsub.s32 3, %v928
        %v930 = vrot.slane %v603, %v929
        %v931 = vlaneseq
        %v932 = vshrl.u32 %v931, 7
        %v933 = vsub.s32 4, %v932
        %v934 = vrot.slane %v603, %v933
        %v935 = vlaneseq
        %v936 = vshrl.u32 %v935, 7
        %v937 = vsub.s32 5, %v936
        %v938 = vrot.slane %v603, %v937
        %v939 = vlaneseq
        %v940 = vshrl.u32 %v939, 7
        %v941 = vsub.s32 6, %v940
        %v942 = vrot.slane %v603, %v941
        %v943 = vlaneseq
        %v944 = vshrl.u32 %v943, 7
        %v945 = vsub.s32 7, %v944
        %v946 = vrot.slane %v603, %v945
        %v947 = vlaneseq
        %v948 = vshrl.u32 %v947, 7
        %v949 = vsub.s32 0, %v948
        %v950 = vrot.slane %v604, %v949
        %v951 = vlaneseq
        %v952 = vshrl.u32 %v951, 7
        %v953 = vsub.s32 1, %v952
        %v954 = vrot.slane %v604, %v953
        %v955 = vlaneseq
        %v956 = vshrl.u32 %v955, 7
        %v957 = vsub.s32 2, %v956
        %v958 = vrot.slane %v604, %v957
        %v959 = vlaneseq
        %v960 = vshrl.u32 %v959, 7
        %v961 = vsub.s32 3, %v960
        %v962 = vrot.slane %v604, %v961
        %v963 = vlaneseq
        %v964 = vshrl.u32 %v963, 7
        %v965 = vsub.s32 4, %v964
        %v966 = vrot.slane %v604, %v965
        %v967 = vlaneseq
        %v968 = vshrl.u32 %v967, 7
        %v969 = vsub.s32 5, %v968
        %v970 = vrot.slane %v604, %v969
        %v971 = vlaneseq
        %v972 = vshrl.u32 %v971, 7
        %v973 = vsub.s32 6, %v972
        %v974 = vrot.slane %v604, %v973
        %v975 = vlaneseq
        %v976 = vshrl.u32 %v975, 7
        %v977 = vsub.s32 7, %v976
        %v978 = vrot.slane %v604, %v977
        %v979 = vlaneseq
        %v980 = vshrl.u32 %v979, 7
        %v981 = vsub.s32 0, %v980
        %v982 = vrot.slane %v605, %v981
        %v983 = vlaneseq
        %v984 = vshrl.u32 %v983, 7
        %v985 = vsub.s32 1, %v984
        %v986 = vrot.slane %v605, %v985
        %v987 = vlaneseq
        %v988 = vshrl.u32 %v987, 7
        %v989 = vsub.s32 2, %v988
        %v990 = vrot.slane %v605, %v989
        %v991 = vlaneseq
        %v992 = vshrl.u32 %v991, 7
        %v993 = vsub.s32 3, %v992
        %v994 = vrot.slane %v605, %v993
        %v995 = vlaneseq
        %v996 = vshrl.u32 %v995, 7
        %v997 = vsub.s32 4, %v996
        %v998 = vrot.slane %v605, %v997
        %v999 = vlaneseq
        %v1000 = vshrl.u32 %v999, 7
        %v1001 = vsub.s32 5, %v1000
        %v1002 = vrot.slane %v605, %v1001
        %v1003 = vlaneseq
        %v1004 = vshrl.u32 %v1003, 7
        %v1005 = vsub.s32 6, %v1004
        %v1006 = vrot.slane %v605, %v1005
        %v1007 = vlaneseq
        %v1008 = vshrl.u32 %v1007, 7
        %v1009 = vsub.s32 7, %v1008
        %v1010 = vrot.slane %v605, %v1009
        %v1011 = vlaneseq
        %v1012 = vshrl.u32 %v1011, 7
        %v1013 = vsub.s32 0, %v1012
        %v1014 = vrot.slane %v606, %v1013
        %v1015 = vlaneseq
        %v1016 = vshrl.u32 %v1015, 7
        %v1017 = vsub.s32 1, %v1016
        %v1018 = vrot.slane %v606, %v1017
        %v1019 = vlaneseq
        %v1020 = vshrl.u32 %v1019, 7
        %v1021 = vsub.s32 2, %v1020
        %v1022 = vrot.slane %v606, %v1021
        %v1023 = vlaneseq
        %v1024 = vshrl.u32 %v1023, 7
        %v1025 = vsub.s32 3, %v1024
        %v1026 = vrot.slane %v606, %v1025
        %v1027 = vlaneseq
        %v1028 = vshrl.u32 %v1027, 7
        %v1029 = vsub.s32 4, %v1028
        %v1030 = vrot.slane %v606, %v1029
        %v1031 = vlaneseq
        %v1032 = vshrl.u32 %v1031, 7
        %v1033 = vsub.s32 5, %v1032
        %v1034 = vrot.slane %v606, %v1033
        %v1035 = vlaneseq
        %v1036 = vshrl.u32 %v1035, 7
        %v1037 = vsub.s32 6, %v1036
        %v1038 = vrot.slane %v606, %v1037
        %v1039 = vlaneseq
        %v1040 = vshrl.u32 %v1039, 7
        %v1041 = vsub.s32 7, %v1040
        %v1042 = vrot.slane %v606, %v1041
        %v1043 = vlaneseq
        %v1044 = vshrl.u32 %v1043, 7
        %v1045 = vsub.s32 0, %v1044
        %v1046 = vrot.slane %v607, %v1045
        %v1047 = vlaneseq
        %v1048 = vshrl.u32 %v1047, 7
        %v1049 = vsub.s32 1, %v1048
        %v1050 = vrot.slane %v607, %v1049
        %v1051 = vlaneseq
        %v1052 = vshrl.u32 %v1051, 7
        %v1053 = vsub.s32 2, %v1052
        %v1054 = vrot.slane %v607, %v1053
        %v1055 = vlaneseq
        %v1056 = vshrl.u32 %v1055, 7
        %v1057 = vsub.s32 3, %v1056
        %v1058 = vrot.slane %v607, %v1057
        %v1059 = vlaneseq
        %v1060 = vshrl.u32 %v1059, 7
        %v1061 = vsub.s32 4, %v1060
        %v1062 = vrot.slane %v607, %v1061
        %v1063 = vlaneseq
        %v1064 = vshrl.u32 %v1063, 7
        %v1065 = vsub.s32 5, %v1064
        %v1066 = vrot.slane %v607, %v1065
        %v1067 = vlaneseq
        %v1068 = vshrl.u32 %v1067, 7
        %v1069 = vsub.s32 6, %v1068
        %v1070 = vrot.slane %v607, %v1069
        %v1071 = vlaneseq
        %v1072 = vshrl.u32 %v1071, 7
        %v1073 = vsub.s32 7, %v1072
        %v1074 = vrot.slane %v607, %v1073
        %v1075 = vlaneseq
        %v1076 = vshrl.u32 %v1075, 7
        %v1077 = vsub.s32 0, %v1076
        %v1078 = vrot.slane %v608, %v1077
        %v1079 = vlaneseq
        %v1080 = vshrl.u32 %v1079, 7
        %v1081 = vsub.s32 1, %v1080
        %v1082 = vrot.slane %v608, %v1081
        %v1083 = vlaneseq
        %v1084 = vshrl.u32 %v1083, 7
        %v1085 = vsub.s32 2, %v1084
        %v1086 = vrot.slane %v608, %v1085
        %v1087 = vlaneseq
        %v1088 = vshrl.u32 %v1087, 7
        %v1089 = vsub.s32 3, %v1088
        %v1090 = vrot.slane %v608, %v1089
        %v1091 = vlaneseq
        %v1092 = vshrl.u32 %v1091, 7
        %v1093 = vsub.s32 4, %v1092
        %v1094 = vrot.slane %v608, %v1093
        %v1095 = vlaneseq
        %v1096 = vshrl.u32 %v1095, 7
        %v1097 = vsub.s32 5, %v1096
        %v1098 = vrot.slane %v608, %v1097
        %v1099 = vlaneseq
        %v1100 = vshrl.u32 %v1099, 7
        %v1101 = vsub.s32 6, %v1100
        %v1102 = vrot.slane %v608, %v1101
        %v1103 = vlaneseq
        %v1104 = vshrl.u32 %v1103, 7
        %v1105 = vsub.s32 7, %v1104
        %v1106 = vrot.slane %v608, %v1105
        %v1107 = vlaneseq
        %v1108 = vshrl.u32 %v1107, 7
        %v1109 = vsub.s32 0, %v1108
        %v1110 = vrot.slane %v609, %v1109
        %v1111 = vlaneseq
        %v1112 = vshrl.u32 %v1111, 7
        %v1113 = vsub.s32 1, %v1112
        %v1114 = vrot.slane %v609, %v1113
        %v1115 = vlaneseq
        %v1116 = vshrl.u32 %v1115, 7
        %v1117 = vsub.s32 2, %v1116
        %v1118 = vrot.slane %v609, %v1117
        %v1119 = vlaneseq
        %v1120 = vshrl.u32 %v1119, 7
        %v1121 = vsub.s32 3, %v1120
        %v1122 = vrot.slane %v609, %v1121
        %v1123 = vlaneseq
        %v1124 = vshrl.u32 %v1123, 7
        %v1125 = vsub.s32 4, %v1124
        %v1126 = vrot.slane %v609, %v1125
        %v1127 = vlaneseq
        %v1128 = vshrl.u32 %v1127, 7
        %v1129 = vsub.s32 5, %v1128
        %v1130 = vrot.slane %v609, %v1129
        %v1131 = vlaneseq
        %v1132 = vshrl.u32 %v1131, 7
        %v1133 = vsub.s32 6, %v1132
        %v1134 = vrot.slane %v609, %v1133
        %v1135 = vlaneseq
        %v1136 = vshrl.u32 %v1135, 7
        %v1137 = vsub.s32 7, %v1136
        %v1138 = vrot.slane %v609, %v1137
        %v1139 = vlaneseq
        %v1140 = vshrl.u32 %v1139, 7
        %v1141 = vsub.s32 0, %v1140
        %v1142 = vrot.slane %v610, %v1141
        %v1143 = vlaneseq
        %v1144 = vshrl.u32 %v1143, 7
        %v1145 = vsub.s32 1, %v1144
        %v1146 = vrot.slane %v610, %v1145
        %v1147 = vlaneseq
        %v1148 = vshrl.u32 %v1147, 7
        %v1149 = vsub.s32 2, %v1148
        %v1150 = vrot.slane %v610, %v1149
        %v1151 = vlaneseq
        %v1152 = vshrl.u32 %v1151, 7
        %v1153 = vsub.s32 3, %v1152
        %v1154 = vrot.slane %v610, %v1153
        %v1155 = vlaneseq
        %v1156 = vshrl.u32 %v1155, 7
        %v1157 = vsub.s32 4, %v1156
        %v1158 = vrot.slane %v610, %v1157
        %v1159 = vlaneseq
        %v1160 = vshrl.u32 %v1159, 7
        %v1161 = vsub.s32 5, %v1160
        %v1162 = vrot.slane %v610, %v1161
        %v1163 = vlaneseq
        %v1164 = vshrl.u32 %v1163, 7
        %v1165 = vsub.s32 6, %v1164
        %v1166 = vrot.slane %v610, %v1165
        %v1167 = vlaneseq
        %v1168 = vshrl.u32 %v1167, 7
        %v1169 = vsub.s32 7, %v1168
        %v1170 = vrot.slane %v610, %v1169
        %v1171 = vlaneseq
        %v1172 = vshrl.u32 %v1171, 7
        %v1173 = vsub.s32 0, %v1172
        %v1174 = vrot.slane %v611, %v1173
        %v1175 = vlaneseq
        %v1176 = vshrl.u32 %v1175, 7
        %v1177 = vsub.s32 1, %v1176
        %v1178 = vrot.slane %v611, %v1177
        %v1179 = vlaneseq
        %v1180 = vshrl.u32 %v1179, 7
        %v1181 = vsub.s32 2, %v1180
        %v1182 = vrot.slane %v611, %v1181
        %v1183 = vlaneseq
        %v1184 = vshrl.u32 %v1183, 7
        %v1185 = vsub.s32 3, %v1184
        %v1186 = vrot.slane %v611, %v1185
        %v1187 = vlaneseq
        %v1188 = vshrl.u32 %v1187, 7
        %v1189 = vsub.s32 4, %v1188
        %v1190 = vrot.slane %v611, %v1189
        %v1191 = vlaneseq
        %v1192 = vshrl.u32 %v1191, 7
        %v1193 = vsub.s32 5, %v1192
        %v1194 = vrot.slane %v611, %v1193
        %v1195 = vlaneseq
        %v1196 = vshrl.u32 %v1195, 7
        %v1197 = vsub.s32 6, %v1196
        %v1198 = vrot.slane %v611, %v1197
        %v1199 = vlaneseq
        %v1200 = vshrl.u32 %v1199, 7
        %v1201 = vsub.s32 7, %v1200
        %v1202 = vrot.slane %v611, %v1201
        %v1203 = vlaneseq
        %v1204 = vshrl.u32 %v1203, 7
        %v1205 = vsub.s32 0, %v1204
        %v1206 = vrot.slane %v612, %v1205
        %v1207 = vlaneseq
        %v1208 = vshrl.u32 %v1207, 7
        %v1209 = vsub.s32 1, %v1208
        %v1210 = vrot.slane %v612, %v1209
        %v1211 = vlaneseq
        %v1212 = vshrl.u32 %v1211, 7
        %v1213 = vsub.s32 2, %v1212
        %v1214 = vrot.slane %v612, %v1213
        %v1215 = vlaneseq
        %v1216 = vshrl.u32 %v1215, 7
        %v1217 = vsub.s32 3, %v1216
        %v1218 = vrot.slane %v612, %v1217
        %v1219 = vlaneseq
        %v1220 = vshrl.u32 %v1219, 7
        %v1221 = vsub.s32 4, %v1220
        %v1222 = vrot.slane %v612, %v1221
        %v1223 = vlaneseq
        %v1224 = vshrl.u32 %v1223, 7
        %v1225 = vsub.s32 5, %v1224
        %v1226 = vrot.slane %v612, %v1225
        %v1227 = vlaneseq
        %v1228 = vshrl.u32 %v1227, 7
        %v1229 = vsub.s32 6, %v1228
        %v1230 = vrot.slane %v612, %v1229
        %v1231 = vlaneseq
        %v1232 = vshrl.u32 %v1231, 7
        %v1233 = vsub.s32 7, %v1232
        %v1234 = vrot.slane %v612, %v1233
        %v1235 = vlaneseq
        %v1236 = vshrl.u32 %v1235, 7
        %v1237 = vsub.s32 0, %v1236
        %v1238 = vrot.slane %v613, %v1237
        %v1239 = vlaneseq
        %v1240 = vshrl.u32 %v1239, 7
        %v1241 = vsub.s32 1, %v1240
        %v1242 = vrot.slane %v613, %v1241
        %v1243 = vlaneseq
        %v1244 = vshrl.u32 %v1243, 7
        %v1245 = vsub.s32 2, %v1244
        %v1246 = vrot.slane %v613, %v1245
        %v1247 = vlaneseq
        %v1248 = vshrl.u32 %v1247, 7
        %v1249 = vsub.s32 3, %v1248
        %v1250 = vrot.slane %v613, %v1249
        %v1251 = vlaneseq
        %v1252 = vshrl.u32 %v1251, 7
        %v1253 = vsub.s32 4, %v1252
        %v1254 = vrot.slane %v613, %v1253
        %v1255 = vlaneseq
        %v1256 = vshrl.u32 %v1255, 7
        %v1257 = vsub.s32 5, %v1256
        %v1258 = vrot.slane %v613, %v1257
        %v1259 = vlaneseq
        %v1260 = vshrl.u32 %v1259, 7
        %v1261 = vsub.s32 6, %v1260
        %v1262 = vrot.slane %v613, %v1261
        %v1263 = vlaneseq
        %v1264 = vshrl.u32 %v1263, 7
        %v1265 = vsub.s32 7, %v1264
        %v1266 = vrot.slane %v613, %v1265
        %v1267 = vlaneseq
        %v1268 = vshrl.u32 %v1267, 7
        %v1269 = vsub.s32 0, %v1268
        %v1270 = vrot.slane %v614, %v1269
        %v1271 = vlaneseq
        %v1272 = vshrl.u32 %v1271, 7
        %v1273 = vsub.s32 1, %v1272
        %v1274 = vrot.slane %v614, %v1273
        %v1275 = vlaneseq
        %v1276 = vshrl.u32 %v1275, 7
        %v1277 = vsub.s32 2, %v1276
        %v1278 = vrot.slane %v614, %v1277
        %v1279 = vlaneseq
        %v1280 = vshrl.u32 %v1279, 7
        %v1281 = vsub.s32 3, %v1280
        %v1282 = vrot.slane %v614, %v1281
        %v1283 = vlaneseq
        %v1284 = vshrl.u32 %v1283, 7
        %v1285 = vsub.s32 4, %v1284
        %v1286 = vrot.slane %v614, %v1285
        %v1287 = vlaneseq
        %v1288 = vshrl.u32 %v1287, 7
        %v1289 = vsub.s32 5, %v1288
        %v1290 = vrot.slane %v614, %v1289
        %v1291 = vlaneseq
        %v1292 = vshrl.u32 %v1291, 7
        %v1293 = vsub.s32 6, %v1292
        %v1294 = vrot.slane %v614, %v1293
        %v1295 = vlaneseq
        %v1296 = vshrl.u32 %v1295, 7
        %v1297 = vsub.s32 7, %v1296
        %v1298 = vrot.slane %v614, %v1297
        %v1299 = vlaneseq
        %v1300 = vshrl.u32 %v1299, 7
        %v1301 = vsub.s32 0, %v1300
        %v1302 = vrot.slane %v615, %v1301
        %v1303 = vlaneseq
        %v1304 = vshrl.u32 %v1303, 7
        %v1305 = vsub.s32 1, %v1304
        %v1306 = vrot.slane %v615, %v1305
        %v1307 = vlaneseq
        %v1308 = vshrl.u32 %v1307, 7
        %v1309 = vsub.s32 2, %v1308
        %v1310 = vrot.slane %v615, %v1309
        %v1311 = vlaneseq
        %v1312 = vshrl.u32 %v1311, 7
        %v1313 = vsub.s32 3, %v1312
        %v1314 = vrot.slane %v615, %v1313
        %v1315 = vlaneseq
        %v1316 = vshrl.u32 %v1315, 7
        %v1317 = vsub.s32 4, %v1316
        %v1318 = vrot.slane %v615, %v1317
        %v1319 = vlaneseq
        %v1320 = vshrl.u32 %v1319, 7
        %v1321 = vsub.s32 5, %v1320
        %v1322 = vrot.slane %v615, %v1321
        %v1323 = vlaneseq
        %v1324 = vshrl.u32 %v1323, 7
        %v1325 = vsub.s32 6, %v1324
        %v1326 = vrot.slane %v615, %v1325
        %v1327 = vlaneseq
        %v1328 = vshrl.u32 %v1327, 7
        %v1329 = vsub.s32 7, %v1328
        %v1330 = vrot.slane %v615, %v1329
        %v1331 = vlaneseq
        %v1332 = vshrl.u32 %v1331, 7
        %v1333 = vsub.s32 0, %v1332
        %v1334 = vrot.slane %v616, %v1333
        %v1335 = vlaneseq
        %v1336 = vshrl.u32 %v1335, 7
        %v1337 = vsub.s32 1, %v1336
        %v1338 = vrot.slane %v616, %v1337
        %v1339 = vlaneseq
        %v1340 = vshrl.u32 %v1339, 7
        %v1341 = vsub.s32 2, %v1340
        %v1342 = vrot.slane %v616, %v1341
        %v1343 = vlaneseq
        %v1344 = vshrl.u32 %v1343, 7
        %v1345 = vsub.s32 3, %v1344
        %v1346 = vrot.slane %v616, %v1345
        %v1347 = vlaneseq
        %v1348 = vshrl.u32 %v1347, 7
        %v1349 = vsub.s32 4, %v1348
        %v1350 = vrot.slane %v616, %v1349
        %v1351 = vlaneseq
        %v1352 = vshrl.u32 %v1351, 7
        %v1353 = vsub.s32 5, %v1352
        %v1354 = vrot.slane %v616, %v1353
        %v1355 = vlaneseq
        %v1356 = vshrl.u32 %v1355, 7
        %v1357 = vsub.s32 6, %v1356
        %v1358 = vrot.slane %v616, %v1357
        %v1359 = vlaneseq
        %v1360 = vshrl.u32 %v1359, 7
        %v1361 = vsub.s32 7, %v1360
        %v1362 = vrot.slane %v616, %v1361
        %v1363 = vlaneseq
        %v1364 = vshrl.u32 %v1363, 7
        %v1365 = vsub.s32 0, %v1364
        %v1366 = vrot.slane %v617, %v1365
        %v1367 = vlaneseq
        %v1368 = vshrl.u32 %v1367, 7
        %v1369 = vsub.s32 1, %v1368
        %v1370 = vrot.slane %v617, %v1369
        %v1371 = vlaneseq
        %v1372 = vshrl.u32 %v1371, 7
        %v1373 = vsub.s32 2, %v1372
        %v1374 = vrot.slane %v617, %v1373
        %v1375 = vlaneseq
        %v1376 = vshrl.u32 %v1375, 7
        %v1377 = vsub.s32 3, %v1376
        %v1378 = vrot.slane %v617, %v1377
        %v1379 = vlaneseq
        %v1380 = vshrl.u32 %v1379, 7
        %v1381 = vsub.s32 4, %v1380
        %v1382 = vrot.slane %v617, %v1381
        %v1383 = vlaneseq
        %v1384 = vshrl.u32 %v1383, 7
        %v1385 = vsub.s32 5, %v1384
        %v1386 = vrot.slane %v617, %v1385
        %v1387 = vlaneseq
        %v1388 = vshrl.u32 %v1387, 7
        %v1389 = vsub.s32 6, %v1388
        %v1390 = vrot.slane %v617, %v1389
        %v1391 = vlaneseq
        %v1392 = vshrl.u32 %v1391, 7
        %v1393 = vsub.s32 7, %v1392
        %v1394 = vrot.slane %v617, %v1393
        %v1395 = vlaneseq
        %v1396 = vshrl.u32 %v1395, 7
        %v1397 = vsub.s32 0, %v1396
        %v1398 = vrot.slane %v618, %v1397
        %v1399 = vlaneseq
        %v1400 = vshrl.u32 %v1399, 7
        %v1401 = vsub.s32 1, %v1400
        %v1402 = vrot.slane %v618, %v1401
        %v1403 = vlaneseq
        %v1404 = vshrl.u32 %v1403, 7
        %v1405 = vsub.s32 2, %v1404
        %v1406 = vrot.slane %v618, %v1405
        %v1407 = vlaneseq
        %v1408 = vshrl.u32 %v1407, 7
        %v1409 = vsub.s32 3, %v1408
        %v1410 = vrot.slane %v618, %v1409
        %v1411 = vlaneseq
        %v1412 = vshrl.u32 %v1411, 7
        %v1413 = vsub.s32 4, %v1412
        %v1414 = vrot.slane %v618, %v1413
        %v1415 = vlaneseq
        %v1416 = vshrl.u32 %v1415, 7
        %v1417 = vsub.s32 5, %v1416
        %v1418 = vrot.slane %v618, %v1417
        %v1419 = vlaneseq
        %v1420 = vshrl.u32 %v1419, 7
        %v1421 = vsub.s32 6, %v1420
        %v1422 = vrot.slane %v618, %v1421
        %v1423 = vlaneseq
        %v1424 = vshrl.u32 %v1423, 7
        %v1425 = vsub.s32 7, %v1424
        %v1426 = vrot.slane %v618, %v1425
        %v1427 = vlaneseq
        %v1428 = vshrl.u32 %v1427, 7
        %v1429 = vsub.s32 0, %v1428
        %v1430 = vrot.slane %v619, %v1429
        %v1431 = vlaneseq
        %v1432 = vshrl.u32 %v1431, 7
        %v1433 = vsub.s32 1, %v1432
        %v1434 = vrot.slane %v619, %v1433
        %v1435 = vlaneseq
        %v1436 = vshrl.u32 %v1435, 7
        %v1437 = vsub.s32 2, %v1436
        %v1438 = vrot.slane %v619, %v1437
        %v1439 = vlaneseq
        %v1440 = vshrl.u32 %v1439, 7
        %v1441 = vsub.s32 3, %v1440
        %v1442 = vrot.slane %v619, %v1441
        %v1443 = vlaneseq
        %v1444 = vshrl.u32 %v1443, 7
        %v1445 = vsub.s32 4, %v1444
        %v1446 = vrot.slane %v619, %v1445
        %v1447 = vlaneseq
        %v1448 = vshrl.u32 %v1447, 7
        %v1449 = vsub.s32 5, %v1448
        %v1450 = vrot.slane %v619, %v1449
        %v1451 = vlaneseq
        %v1452 = vshrl.u32 %v1451, 7
        %v1453 = vsub.s32 6, %v1452
        %v1454 = vrot.slane %v619, %v1453
        %v1455 = vlaneseq
        %v1456 = vshrl.u32 %v1455, 7
        %v1457 = vsub.s32 7, %v1456
        %v1458 = vrot.slane %v619, %v1457
        %v1459 = vlaneseq
        %v1460 = vshrl.u32 %v1459, 7
        %v1461 = vsub.s32 0, %v1460
        %v1462 = vrot.slane %v620, %v1461
        %v1463 = vlaneseq
        %v1464 = vshrl.u32 %v1463, 7
        %v1465 = vsub.s32 1, %v1464
        %v1466 = vrot.slane %v620, %v1465
        %v1467 = vlaneseq
        %v1468 = vshrl.u32 %v1467, 7
        %v1469 = vsub.s32 2, %v1468
        %v1470 = vrot.slane %v620, %v1469
        %v1471 = vlaneseq
        %v1472 = vshrl.u32 %v1471, 7
        %v1473 = vsub.s32 3, %v1472
        %v1474 = vrot.slane %v620, %v1473
        %v1475 = vlaneseq
        %v1476 = vshrl.u32 %v1475, 7
        %v1477 = vsub.s32 4, %v1476
        %v1478 = vrot.slane %v620, %v1477
        %v1479 = vlaneseq
        %v1480 = vshrl.u32 %v1479, 7
        %v1481 = vsub.s32 5, %v1480
        %v1482 = vrot.slane %v620, %v1481
        %v1483 = vlaneseq
        %v1484 = vshrl.u32 %v1483, 7
        %v1485 = vsub.s32 6, %v1484
        %v1486 = vrot.slane %v620, %v1485
        %v1487 = vlaneseq
        %v1488 = vshrl.u32 %v1487, 7
        %v1489 = vsub.s32 7, %v1488
        %v1490 = vrot.slane %v620, %v1489
        %v1491 = vlaneseq
        %v1492 = vshrl.u32 %v1491, 7
        %v1493 = vsub.s32 0, %v1492
        %v1494 = vrot.slane %v621, %v1493
        %v1495 = vlaneseq
        %v1496 = vshrl.u32 %v1495, 7
        %v1497 = vsub.s32 1, %v1496
        %v1498 = vrot.slane %v621, %v1497
        %v1499 = vlaneseq
        %v1500 = vshrl.u32 %v1499, 7
        %v1501 = vsub.s32 2, %v1500
        %v1502 = vrot.slane %v621, %v1501
        %v1503 = vlaneseq
        %v1504 = vshrl.u32 %v1503, 7
        %v1505 = vsub.s32 3, %v1504
        %v1506 = vrot.slane %v621, %v1505
        %v1507 = vlaneseq
        %v1508 = vshrl.u32 %v1507, 7
        %v1509 = vsub.s32 4, %v1508
        %v1510 = vrot.slane %v621, %v1509
        %v1511 = vlaneseq
        %v1512 = vshrl.u32 %v1511, 7
        %v1513 = vsub.s32 5, %v1512
        %v1514 = vrot.slane %v621, %v1513
        %v1515 = vlaneseq
        %v1516 = vshrl.u32 %v1515, 7
        %v1517 = vsub.s32 6, %v1516
        %v1518 = vrot.slane %v621, %v1517
        %v1519 = vlaneseq
        %v1520 = vshrl.u32 %v1519, 7
        %v1521 = vsub.s32 7, %v1520
        %v1522 = vrot.slane %v621, %v1521
        %v1523 = vlaneseq
        %v1524 = vshrl.u32 %v1523, 7
        %v1525 = vsub.s32 0, %v1524
        %v1526 = vrot.slane %v622, %v1525
        %v1527 = vlaneseq
        %v1528 = vshrl.u32 %v1527, 7
        %v1529 = vsub.s32 1, %v1528
        %v1530 = vrot.slane %v622, %v1529
        %v1531 = vlaneseq
        %v1532 = vshrl.u32 %v1531, 7
        %v1533 = vsub.s32 2, %v1532
        %v1534 = vrot.slane %v622, %v1533
        %v1535 = vlaneseq
        %v1536 = vshrl.u32 %v1535, 7
        %v1537 = vsub.s32 3, %v1536
        %v1538 = vrot.slane %v622, %v1537
        %v1539 = vlaneseq
        %v1540 = vshrl.u32 %v1539, 7
        %v1541 = vsub.s32 4, %v1540
        %v1542 = vrot.slane %v622, %v1541
        %v1543 = vlaneseq
        %v1544 = vshrl.u32 %v1543, 7
        %v1545 = vsub.s32 5, %v1544
        %v1546 = vrot.slane %v622, %v1545
        %v1547 = vlaneseq
        %v1548 = vshrl.u32 %v1547, 7
        %v1549 = vsub.s32 6, %v1548
        %v1550 = vrot.slane %v622, %v1549
        %v1551 = vlaneseq
        %v1552 = vshrl.u32 %v1551, 7
        %v1553 = vsub.s32 7, %v1552
        %v1554 = vrot.slane %v622, %v1553
        %v1555 = vlaneseq
        %v1556 = vshrl.u32 %v1555, 7
        %v1557 = vsub.s32 0, %v1556
        %v1558 = vrot.slane %v623, %v1557
        %v1559 = vlaneseq
        %v1560 = vshrl.u32 %v1559, 7
        %v1561 = vsub.s32 1, %v1560
        %v1562 = vrot.slane %v623, %v1561
        %v1563 = vlaneseq
        %v1564 = vshrl.u32 %v1563, 7
        %v1565 = vsub.s32 2, %v1564
        %v1566 = vrot.slane %v623, %v1565
        %v1567 = vlaneseq
        %v1568 = vshrl.u32 %v1567, 7
        %v1569 = vsub.s32 3, %v1568
        %v1570 = vrot.slane %v623, %v1569
        %v1571 = vlaneseq
        %v1572 = vshrl.u32 %v1571, 7
        %v1573 = vsub.s32 4, %v1572
        %v1574 = vrot.slane %v623, %v1573
        %v1575 = vlaneseq
        %v1576 = vshrl.u32 %v1575, 7
        %v1577 = vsub.s32 5, %v1576
        %v1578 = vrot.slane %v623, %v1577
        %v1579 = vlaneseq
        %v1580 = vshrl.u32 %v1579, 7
        %v1581 = vsub.s32 6, %v1580
        %v1582 = vrot.slane %v623, %v1581
        %v1583 = vlaneseq
        %v1584 = vshrl.u32 %v1583, 7
        %v1585 = vsub.s32 7, %v1584
        %v1586 = vrot.slane %v623, %v1585
        %v1587 = vlaneseq
        %v1588 = vshrl.u32 %v1587, 7
        %v1589 = vsub.s32 0, %v1588
        %v1590 = vrot.slane %v624, %v1589
        %v1591 = vlaneseq
        %v1592 = vshrl.u32 %v1591, 7
        %v1593 = vsub.s32 1, %v1592
        %v1594 = vrot.slane %v624, %v1593
        %v1595 = vlaneseq
        %v1596 = vshrl.u32 %v1595, 7
        %v1597 = vsub.s32 2, %v1596
        %v1598 = vrot.slane %v624, %v1597
        %v1599 = vlaneseq
        %v1600 = vshrl.u32 %v1599, 7
        %v1601 = vsub.s32 3, %v1600
        %v1602 = vrot.slane %v624, %v1601
        %v1603 = vlaneseq
        %v1604 = vshrl.u32 %v1603, 7
        %v1605 = vsub.s32 4, %v1604
        %v1606 = vrot.slane %v624, %v1605
        %v1607 = vlaneseq
        %v1608 = vshrl.u32 %v1607, 7
        %v1609 = vsub.s32 5, %v1608
        %v1610 = vrot.slane %v624, %v1609
        %v1611 = vlaneseq
        %v1612 = vshrl.u32 %v1611, 7
        %v1613 = vsub.s32 6, %v1612
        %v1614 = vrot.slane %v624, %v1613
        %v1615 = vlaneseq
        %v1616 = vshrl.u32 %v1615, 7
        %v1617 = vsub.s32 7, %v1616
        %v1618 = vrot.slane %v624, %v1617
        %v1619 = vlaneseq
        %v1620 = vshrl.u32 %v1619, 7
        %v1621 = vsub.s32 0, %v1620
        %v1622 = vrot.slane %v625, %v1621
        %v1623 = vlaneseq
        %v1624 = vshrl.u32 %v1623, 7
        %v1625 = vsub.s32 1, %v1624
        %v1626 = vrot.slane %v625, %v1625
        %v1627 = vlaneseq
        %v1628 = vshrl.u32 %v1627, 7
        %v1629 = vsub.s32 2, %v1628
        %v1630 = vrot.slane %v625, %v1629
        %v1631 = vlaneseq
        %v1632 = vshrl.u32 %v1631, 7
        %v1633 = vsub.s32 3, %v1632
        %v1634 = vrot.slane %v625, %v1633
        %v1635 = vlaneseq
        %v1636 = vshrl.u32 %v1635, 7
        %v1637 = vsub.s32 4, %v1636
        %v1638 = vrot.slane %v625, %v1637
        %v1639 = vlaneseq
        %v1640 = vshrl.u32 %v1639, 7
        %v1641 = vsub.s32 5, %v1640
        %v1642 = vrot.slane %v625, %v1641
        %v1643 = vlaneseq
        %v1644 = vshrl.u32 %v1643, 7
        %v1645 = vsub.s32 6, %v1644
        %v1646 = vrot.slane %v625, %v1645
        %v1647 = vlaneseq
        %v1648 = vshrl.u32 %v1647, 7
        %v1649 = vsub.s32 7, %v1648
        %v1650 = vrot.slane %v625, %v1649
        %v1651 = vlaneseq
        %v1652 = vshrl.u32 %v1651, 7
        %v1653 = vsub.s32 0, %v1652
        %v1654 = vrot.slane %v626, %v1653
        %v1655 = vlaneseq
        %v1656 = vshrl.u32 %v1655, 7
        %v1657 = vsub.s32 1, %v1656
        %v1658 = vrot.slane %v626, %v1657
        %v1659 = vlaneseq
        %v1660 = vshrl.u32 %v1659, 7
        %v1661 = vsub.s32 2, %v1660
        %v1662 = vrot.slane %v626, %v1661
        %v1663 = vlaneseq
        %v1664 = vshrl.u32 %v1663, 7
        %v1665 = vsub.s32 3, %v1664
        %v1666 = vrot.slane %v626, %v1665
        %v1667 = vlaneseq
        %v1668 = vshrl.u32 %v1667, 7
        %v1669 = vsub.s32 4, %v1668
        %v1670 = vrot.slane %v626, %v1669
        %v1671 = vlaneseq
        %v1672 = vshrl.u32 %v1671, 7
        %v1673 = vsub.s32 5, %v1672
        %v1674 = vrot.slane %v626, %v1673
        %v1675 = vlaneseq
        %v1676 = vshrl.u32 %v1675, 7
        %v1677 = vsub.s32 6, %v1676
        %v1678 = vrot.slane %v626, %v1677
        %v1679 = vlaneseq
        %v1680 = vshrl.u32 %v1679, 7
        %v1681 = vsub.s32 7, %v1680
        %v1682 = vrot.slane %v626, %v1681
        %v1683 = vcombine.low %v662, %v666
        %v1684 = vcombine.low %v670, %v674
        %v1685 = vcombine.low %v678, %v682
        %v1686 = vcombine.low %v686, %v690
        %v1688 = vunpack.c.l.s4 1966171168
        %v1689 = vunpack.c.0.s8 %v1688
        %v1690 = vlaneseq
        %v1691 = vshrl.u32 %v1690, 7
        %v1692 = vsub.s32 %v1689, %v1691
        %v1693 = vrot.slane %v1683, %v1692
        %v1695 = vunpack.c.l.s4 1966171168
        %v1696 = vunpack.c.0.s8 %v1695
        %v1697 = vlaneseq
        %v1698 = vshrl.u32 %v1697, 7
        %v1699 = vsub.s32 %v1696, %v1698
        %v1700 = vrot.slane %v1684, %v1699
        %v1702 = vunpack.c.l.s4 1966171168
        %v1703 = vunpack.c.0.s8 %v1702
        %v1704 = vlaneseq
        %v1705 = vshrl.u32 %v1704, 7
        %v1706 = vsub.s32 %v1703, %v1705
        %v1707 = vrot.slane %v1685, %v1706
        %v1709 = vunpack.c.l.s4 1966171168
        %v1710 = vunpack.c.0.s8 %v1709
        %v1711 = vlaneseq
        %v1712 = vshrl.u32 %v1711, 7
        %v1713 = vsub.s32 %v1710, %v1712
        %v1714 = vrot.slane %v1686, %v1713
        %v1715 = vcombine.low %v1693, %v1700
        %v1716 = vcombine.low %v1707, %v1714
        %v1718 = vunpack.c.l.s4 1966171168
        %v1719 = vunpack.c.0.s8 %v1718
        %v1720 = vlaneseq
        %v1721 = vshrl.u32 %v1720, 7
        %v1722 = vsub.s32 %v1719, %v1721
        %v1723 = vrot.slane %v1715, %v1722
        %v1725 = vunpack.c.l.s4 1966171168
        %v1726 = vunpack.c.0.s8 %v1725
        %v1727 = vlaneseq
        %v1728 = vshrl.u32 %v1727, 7
        %v1729 = vsub.s32 %v1726, %v1728
        %v1730 = vrot.slane %v1716, %v1729
        %v1731 = vcombine.low %v1723, %v1730
        %v1732 = vcombine.low %v694, %v698
        %v1733 = vcombine.low %v702, %v706
        %v1734 = vcombine.low %v710, %v714
        %v1735 = vcombine.low %v718, %v722
        %v1737 = vunpack.c.l.s4 1966171168
        %v1738 = vunpack.c.0.s8 %v1737
        %v1739 = vlaneseq
        %v1740 = vshrl.u32 %v1739, 7
        %v1741 = vsub.s32 %v1738, %v1740
        %v1742 = vrot.slane %v1732, %v1741
        %v1744 = vunpack.c.l.s4 1966171168
        %v1745 = vunpack.c.0.s8 %v1744
        %v1746 = vlaneseq
        %v1747 = vshrl.u32 %v1746, 7
        %v1748 = vsub.s32 %v1745, %v1747
        %v1749 = vrot.slane %v1733, %v1748
        %v1751 = vunpack.c.l.s4 1966171168
        %v1752 = vunpack.c.0.s8 %v1751
        %v1753 = vlaneseq
        %v1754 = vshrl.u32 %v1753, 7
        %v1755 = vsub.s32 %v1752, %v1754
        %v1756 = vrot.slane %v1734, %v1755
        %v1758 = vunpack.c.l.s4 1966171168
        %v1759 = vunpack.c.0.s8 %v1758
        %v1760 = vlaneseq
        %v1761 = vshrl.u32 %v1760, 7
        %v1762 = vsub.s32 %v1759, %v1761
        %v1763 = vrot.slane %v1735, %v1762
        %v1764 = vcombine.low %v1742, %v1749
        %v1765 = vcombine.low %v1756, %v1763
        %v1767 = vunpack.c.l.s4 1966171168
        %v1768 = vunpack.c.0.s8 %v1767
        %v1769 = vlaneseq
        %v1770 = vshrl.u32 %v1769, 7
        %v1771 = vsub.s32 %v1768, %v1770
        %v1772 = vrot.slane %v1764, %v1771
        %v1774 = vunpack.c.l.s4 1966171168
        %v1775 = vunpack.c.0.s8 %v1774
        %v1776 = vlaneseq
        %v1777 = vshrl.u32 %v1776, 7
        %v1778 = vsub.s32 %v1775, %v1777
        %v1779 = vrot.slane %v1765, %v1778
        %v1780 = vcombine.low %v1772, %v1779
        %v1781 = vcombine.low %v726, %v730
        %v1782 = vcombine.low %v734, %v738
        %v1783 = vcombine.low %v742, %v746
        %v1784 = vcombine.low %v750, %v754
        %v1786 = vunpack.c.l.s4 1966171168
        %v1787 = vunpack.c.0.s8 %v1786
        %v1788 = vlaneseq
        %v1789 = vshrl.u32 %v1788, 7
        %v1790 = vsub.s32 %v1787, %v1789
        %v1791 = vrot.slane %v1781, %v1790
        %v1793 = vunpack.c.l.s4 1966171168
        %v1794 = vunpack.c.0.s8 %v1793
        %v1795 = vlaneseq
        %v1796 = vshrl.u32 %v1795, 7
        %v1797 = vsub.s32 %v1794, %v1796
        %v1798 = vrot.slane %v1782, %v1797
        %v1800 = vunpack.c.l.s4 1966171168
        %v1801 = vunpack.c.0.s8 %v1800
        %v1802 = vlaneseq
        %v1803 = vshrl.u32 %v1802, 7
        %v1804 = vsub.s32 %v1801, %v1803
        %v1805 = vrot.slane %v1783, %v1804
        %v1807 = vunpack.c.l.s4 1966171168
        %v1808 = vunpack.c.0.s8 %v1807
        %v1809 = vlaneseq
        %v1810 = vshrl.u32 %v1809, 7
        %v1811 = vsub.s32 %v1808, %v1810
        %v1812 = vrot.slane %v1784, %v1811
        %v1813 = vcombine.low %v1791, %v1798
        %v1814 = vcombine.low %v1805, %v1812
        %v1816 = vunpack.c.l.s4 1966171168
        %v1817 = vunpack.c.0.s8 %v1816
        %v1818 = vlaneseq
        %v1819 = vshrl.u32 %v1818, 7
        %v1820 = vsub.s32 %v1817, %v1819
        %v1821 = vrot.slane %v1813, %v1820
        %v1823 = vunpack.c.l.s4 1966171168
        %v1824 = vunpack.c.0.s8 %v1823
        %v1825 = vlaneseq
        %v1826 = vshrl.u32 %v1825, 7
        %v1827 = vsub.s32 %v1824, %v1826
        %v1828 = vrot.slane %v1814, %v1827
        %v1829 = vcombine.low %v1821, %v1828
        %v1830 = vcombine.low %v758, %v762
        %v1831 = vcombine.low %v766, %v770
        %v1832 = vcombine.low %v774, %v778
        %v1833 = vcombine.low %v782, %v786
        %v1835 = vunpack.c.l.s4 1966171168
        %v1836 = vunpack.c.0.s8 %v1835
        %v1837 = vlaneseq
        %v1838 = vshrl.u32 %v1837, 7
        %v1839 = vsub.s32 %v1836, %v1838
        %v1840 = vrot.slane %v1830, %v1839
        %v1842 = vunpack.c.l.s4 1966171168
        %v1843 = vunpack.c.0.s8 %v1842
        %v1844 = vlaneseq
        %v1845 = vshrl.u32 %v1844, 7
        %v1846 = vsub.s32 %v1843, %v1845
        %v1847 = vrot.slane %v1831, %v1846
        %v1849 = vunpack.c.l.s4 1966171168
        %v1850 = vunpack.c.0.s8 %v1849
        %v1851 = vlaneseq
        %v1852 = vshrl.u32 %v1851, 7
        %v1853 = vsub.s32 %v1850, %v1852
        %v1854 = vrot.slane %v1832, %v1853
        %v1856 = vunpack.c.l.s4 1966171168
        %v1857 = vunpack.c.0.s8 %v1856
        %v1858 = vlaneseq
        %v1859 = vshrl.u32 %v1858, 7
        %v1860 = vsub.s32 %v1857, %v1859
        %v1861 = vrot.slane %v1833, %v1860
        %v1862 = vcombine.low %v1840, %v1847
        %v1863 = vcombine.low %v1854, %v1861
        %v1865 = vunpack.c.l.s4 1966171168
        %v1866 = vunpack.c.0.s8 %v1865
        %v1867 = vlaneseq
        %v1868 = vshrl.u32 %v1867, 7
        %v1869 = vsub.s32 %v1866, %v1868
        %v1870 = vrot.slane %v1862, %v1869
        %v1872 = vunpack.c.l.s4 1966171168
        %v1873 = vunpack.c.0.s8 %v1872
        %v1874 = vlaneseq
        %v1875 = vshrl.u32 %v1874, 7
        %v1876 = vsub.s32 %v1873, %v1875
        %v1877 = vrot.slane %v1863, %v1876
        %v1878 = vcombine.low %v1870, %v1877
        %v1879 = vcombine.low %v790, %v794
        %v1880 = vcombine.low %v798, %v802
        %v1881 = vcombine.low %v806, %v810
        %v1882 = vcombine.low %v814, %v818
        %v1884 = vunpack.c.l.s4 1966171168
        %v1885 = vunpack.c.0.s8 %v1884
        %v1886 = vlaneseq
        %v1887 = vshrl.u32 %v1886, 7
        %v1888 = vsub.s32 %v1885, %v1887
        %v1889 = vrot.slane %v1879, %v1888
        %v1891 = vunpack.c.l.s4 1966171168
        %v1892 = vunpack.c.0.s8 %v1891
        %v1893 = vlaneseq
        %v1894 = vshrl.u32 %v1893, 7
        %v1895 = vsub.s32 %v1892, %v1894
        %v1896 = vrot.slane %v1880, %v1895
        %v1898 = vunpack.c.l.s4 1966171168
        %v1899 = vunpack.c.0.s8 %v1898
        %v1900 = vlaneseq
        %v1901 = vshrl.u32 %v1900, 7
        %v1902 = vsub.s32 %v1899, %v1901
        %v1903 = vrot.slane %v1881, %v1902
        %v1905 = vunpack.c.l.s4 1966171168
        %v1906 = vunpack.c.0.s8 %v1905
        %v1907 = vlaneseq
        %v1908 = vshrl.u32 %v1907, 7
        %v1909 = vsub.s32 %v1906, %v1908
        %v1910 = vrot.slane %v1882, %v1909
        %v1911 = vcombine.low %v1889, %v1896
        %v1912 = vcombine.low %v1903, %v1910
        %v1914 = vunpack.c.l.s4 1966171168
        %v1915 = vunpack.c.0.s8 %v1914
        %v1916 = vlaneseq
        %v1917 = vshrl.u32 %v1916, 7
        %v1918 = vsub.s32 %v1915, %v1917
        %v1919 = vrot.slane %v1911, %v1918
        %v1921 = vunpack.c.l.s4 1966171168
        %v1922 = vunpack.c.0.s8 %v1921
        %v1923 = vlaneseq
        %v1924 = vshrl.u32 %v1923, 7
        %v1925 = vsub.s32 %v1922, %v1924
        %v1926 = vrot.slane %v1912, %v1925
        %v1927 = vcombine.low %v1919, %v1926
        %v1928 = vcombine.low %v822, %v826
        %v1929 = vcombine.low %v830, %v834
        %v1930 = vcombine.low %v838, %v842
        %v1931 = vcombine.low %v846, %v850
        %v1933 = vunpack.c.l.s4 1966171168
        %v1934 = vunpack.c.0.s8 %v1933
        %v1935 = vlaneseq
        %v1936 = vshrl.u32 %v1935, 7
        %v1937 = vsub.s32 %v1934, %v1936
        %v1938 = vrot.slane %v1928, %v1937
        %v1940 = vunpack.c.l.s4 1966171168
        %v1941 = vunpack.c.0.s8 %v1940
        %v1942 = vlaneseq
        %v1943 = vshrl.u32 %v1942, 7
        %v1944 = vsub.s32 %v1941, %v1943
        %v1945 = vrot.slane %v1929, %v1944
        %v1947 = vunpack.c.l.s4 1966171168
        %v1948 = vunpack.c.0.s8 %v1947
        %v1949 = vlaneseq
        %v1950 = vshrl.u32 %v1949, 7
        %v1951 = vsub.s32 %v1948, %v1950
        %v1952 = vrot.slane %v1930, %v1951
        %v1954 = vunpack.c.l.s4 1966171168
        %v1955 = vunpack.c.0.s8 %v1954
        %v1956 = vlaneseq
        %v1957 = vshrl.u32 %v1956, 7
        %v1958 = vsub.s32 %v1955, %v1957
        %v1959 = vrot.slane %v1931, %v1958
        %v1960 = vcombine.low %v1938, %v1945
        %v1961 = vcombine.low %v1952, %v1959
        %v1963 = vunpack.c.l.s4 1966171168
        %v1964 = vunpack.c.0.s8 %v1963
        %v1965 = vlaneseq
        %v1966 = vshrl.u32 %v1965, 7
        %v1967 = vsub.s32 %v1964, %v1966
        %v1968 = vrot.slane %v1960, %v1967
        %v1970 = vunpack.c.l.s4 1966171168
        %v1971 = vunpack.c.0.s8 %v1970
        %v1972 = vlaneseq
        %v1973 = vshrl.u32 %v1972, 7
        %v1974 = vsub.s32 %v1971, %v1973
        %v1975 = vrot.slane %v1961, %v1974
        %v1976 = vcombine.low %v1968, %v1975
        %v1977 = vcombine.low %v854, %v858
        %v1978 = vcombine.low %v862, %v866
        %v1979 = vcombine.low %v870, %v874
        %v1980 = vcombine.low %v878, %v882
        %v1982 = vunpack.c.l.s4 1966171168
        %v1983 = vunpack.c.0.s8 %v1982
        %v1984 = vlaneseq
        %v1985 = vshrl.u32 %v1984, 7
        %v1986 = vsub.s32 %v1983, %v1985
        %v1987 = vrot.slane %v1977, %v1986
        %v1989 = vunpack.c.l.s4 1966171168
        %v1990 = vunpack.c.0.s8 %v1989
        %v1991 = vlaneseq
        %v1992 = vshrl.u32 %v1991, 7
        %v1993 = vsub.s32 %v1990, %v1992
        %v1994 = vrot.slane %v1978, %v1993
        %v1996 = vunpack.c.l.s4 1966171168
        %v1997 = vunpack.c.0.s8 %v1996
        %v1998 = vlaneseq
        %v1999 = vshrl.u32 %v1998, 7
        %v2000 = vsub.s32 %v1997, %v1999
        %v2001 = vrot.slane %v1979, %v2000
        %v2003 = vunpack.c.l.s4 1966171168
        %v2004 = vunpack.c.0.s8 %v2003
        %v2005 = vlaneseq
        %v2006 = vshrl.u32 %v2005, 7
        %v2007 = vsub.s32 %v2004, %v2006
        %v2008 = vrot.slane %v1980, %v2007
        %v2009 = vcombine.low %v1987, %v1994
        %v2010 = vcombine.low %v2001, %v2008
        %v2012 = vunpack.c.l.s4 1966171168
        %v2013 = vunpack.c.0.s8 %v2012
        %v2014 = vlaneseq
        %v2015 = vshrl.u32 %v2014, 7
        %v2016 = vsub.s32 %v2013, %v2015
        %v2017 = vrot.slane %v2009, %v2016
        %v2019 = vunpack.c.l.s4 1966171168
        %v2020 = vunpack.c.0.s8 %v2019
        %v2021 = vlaneseq
        %v2022 = vshrl.u32 %v2021, 7
        %v2023 = vsub.s32 %v2020, %v2022
        %v2024 = vrot.slane %v2010, %v2023
        %v2025 = vcombine.low %v2017, %v2024
        %v2026 = vcombine.low %v886, %v890
        %v2027 = vcombine.low %v894, %v898
        %v2028 = vcombine.low %v902, %v906
        %v2029 = vcombine.low %v910, %v914
        %v2031 = vunpack.c.l.s4 1966171168
        %v2032 = vunpack.c.0.s8 %v2031
        %v2033 = vlaneseq
        %v2034 = vshrl.u32 %v2033, 7
        %v2035 = vsub.s32 %v2032, %v2034
        %v2036 = vrot.slane %v2026, %v2035
        %v2038 = vunpack.c.l.s4 1966171168
        %v2039 = vunpack.c.0.s8 %v2038
        %v2040 = vlaneseq
        %v2041 = vshrl.u32 %v2040, 7
        %v2042 = vsub.s32 %v2039, %v2041
        %v2043 = vrot.slane %v2027, %v2042
        %v2045 = vunpack.c.l.s4 1966171168
        %v2046 = vunpack.c.0.s8 %v2045
        %v2047 = vlaneseq
        %v2048 = vshrl.u32 %v2047, 7
        %v2049 = vsub.s32 %v2046, %v2048
        %v2050 = vrot.slane %v2028, %v2049
        %v2052 = vunpack.c.l.s4 1966171168
        %v2053 = vunpack.c.0.s8 %v2052
        %v2054 = vlaneseq
        %v2055 = vshrl.u32 %v2054, 7
        %v2056 = vsub.s32 %v2053, %v2055
        %v2057 = vrot.slane %v2029, %v2056
        %v2058 = vcombine.low %v2036, %v2043
        %v2059 = vcombine.low %v2050, %v2057
        %v2061 = vunpack.c.l.s4 1966171168
        %v2062 = vunpack.c.0.s8 %v2061
        %v2063 = vlaneseq
        %v2064 = vshrl.u32 %v2063, 7
        %v2065 = vsub.s32 %v2062, %v2064
        %v2066 = vrot.slane %v2058, %v2065
        %v2068 = vunpack.c.l.s4 1966171168
        %v2069 = vunpack.c.0.s8 %v2068
        %v2070 = vlaneseq
        %v2071 = vshrl.u32 %v2070, 7
        %v2072 = vsub.s32 %v2069, %v2071
        %v2073 = vrot.slane %v2059, %v2072
        %v2074 = vcombine.low %v2066, %v2073
        %v2075 = vcombine.low %v918, %v922
        %v2076 = vcombine.low %v926, %v930
        %v2077 = vcombine.low %v934, %v938
        %v2078 = vcombine.low %v942, %v946
        %v2080 = vunpack.c.l.s4 1966171168
        %v2081 = vunpack.c.0.s8 %v2080
        %v2082 = vlaneseq
        %v2083 = vshrl.u32 %v2082, 7
        %v2084 = vsub.s32 %v2081, %v2083
        %v2085 = vrot.slane %v2075, %v2084
        %v2087 = vunpack.c.l.s4 1966171168
        %v2088 = vunpack.c.0.s8 %v2087
        %v2089 = vlaneseq
        %v2090 = vshrl.u32 %v2089, 7
        %v2091 = vsub.s32 %v2088, %v2090
        %v2092 = vrot.slane %v2076, %v2091
        %v2094 = vunpack.c.l.s4 1966171168
        %v2095 = vunpack.c.0.s8 %v2094
        %v2096 = vlaneseq
        %v2097 = vshrl.u32 %v2096, 7
        %v2098 = vsub.s32 %v2095, %v2097
        %v2099 = vrot.slane %v2077, %v2098
        %v2101 = vunpack.c.l.s4 1966171168
        %v2102 = vunpack.c.0.s8 %v2101
        %v2103 = vlaneseq
        %v2104 = vshrl.u32 %v2103, 7
        %v2105 = vsub.s32 %v2102, %v2104
        %v2106 = vrot.slane %v2078, %v2105
        %v2107 = vcombine.low %v2085, %v2092
        %v2108 = vcombine.low %v2099, %v2106
        %v2110 = vunpack.c.l.s4 1966171168
        %v2111 = vunpack.c.0.s8 %v2110
        %v2112 = vlaneseq
        %v2113 = vshrl.u32 %v2112, 7
        %v2114 = vsub.s32 %v2111, %v2113
        %v2115 = vrot.slane %v2107, %v2114
        %v2117 = vunpack.c.l.s4 1966171168
        %v2118 = vunpack.c.0.s8 %v2117
        %v2119 = vlaneseq
        %v2120 = vshrl.u32 %v2119, 7
        %v2121 = vsub.s32 %v2118, %v2120
        %v2122 = vrot.slane %v2108, %v2121
        %v2123 = vcombine.low %v2115, %v2122
        %v2124 = vcombine.low %v950, %v954
        %v2125 = vcombine.low %v958, %v962
        %v2126 = vcombine.low %v966, %v970
        %v2127 = vcombine.low %v974, %v978
        %v2129 = vunpack.c.l.s4 1966171168
        %v2130 = vunpack.c.0.s8 %v2129
        %v2131 = vlaneseq
        %v2132 = vshrl.u32 %v2131, 7
        %v2133 = vsub.s32 %v2130, %v2132
        %v2134 = vrot.slane %v2124, %v2133
        %v2136 = vunpack.c.l.s4 1966171168
        %v2137 = vunpack.c.0.s8 %v2136
        %v2138 = vlaneseq
        %v2139 = vshrl.u32 %v2138, 7
        %v2140 = vsub.s32 %v2137, %v2139
        %v2141 = vrot.slane %v2125, %v2140
        %v2143 = vunpack.c.l.s4 1966171168
        %v2144 = vunpack.c.0.s8 %v2143
        %v2145 = vlaneseq
        %v2146 = vshrl.u32 %v2145, 7
        %v2147 = vsub.s32 %v2144, %v2146
        %v2148 = vrot.slane %v2126, %v2147
        %v2150 = vunpack.c.l.s4 1966171168
        %v2151 = vunpack.c.0.s8 %v2150
        %v2152 = vlaneseq
        %v2153 = vshrl.u32 %v2152, 7
        %v2154 = vsub.s32 %v2151, %v2153
        %v2155 = vrot.slane %v2127, %v2154
        %v2156 = vcombine.low %v2134, %v2141
        %v2157 = vcombine.low %v2148, %v2155
        %v2159 = vunpack.c.l.s4 1966171168
        %v2160 = vunpack.c.0.s8 %v2159
        %v2161 = vlaneseq
        %v2162 = vshrl.u32 %v2161, 7
        %v2163 = vsub.s32 %v2160, %v2162
        %v2164 = vrot.slane %v2156, %v2163
        %v2166 = vunpack.c.l.s4 1966171168
        %v2167 = vunpack.c.0.s8 %v2166
        %v2168 = vlaneseq
        %v2169 = vshrl.u32 %v2168, 7
        %v2170 = vsub.s32 %v2167, %v2169
        %v2171 = vrot.slane %v2157, %v2170
        %v2172 = vcombine.low %v2164, %v2171
        %v2173 = vcombine.low %v982, %v986
        %v2174 = vcombine.low %v990, %v994
        %v2175 = vcombine.low %v998, %v1002
        %v2176 = vcombine.low %v1006, %v1010
        %v2178 = vunpack.c.l.s4 1966171168
        %v2179 = vunpack.c.0.s8 %v2178
        %v2180 = vlaneseq
        %v2181 = vshrl.u32 %v2180, 7
        %v2182 = vsub.s32 %v2179, %v2181
        %v2183 = vrot.slane %v2173, %v2182
        %v2185 = vunpack.c.l.s4 1966171168
        %v2186 = vunpack.c.0.s8 %v2185
        %v2187 = vlaneseq
        %v2188 = vshrl.u32 %v2187, 7
        %v2189 = vsub.s32 %v2186, %v2188
        %v2190 = vrot.slane %v2174, %v2189
        %v2192 = vunpack.c.l.s4 1966171168
        %v2193 = vunpack.c.0.s8 %v2192
        %v2194 = vlaneseq
        %v2195 = vshrl.u32 %v2194, 7
        %v2196 = vsub.s32 %v2193, %v2195
        %v2197 = vrot.slane %v2175, %v2196
        %v2199 = vunpack.c.l.s4 1966171168
        %v2200 = vunpack.c.0.s8 %v2199
        %v2201 = vlaneseq
        %v2202 = vshrl.u32 %v2201, 7
        %v2203 = vsub.s32 %v2200, %v2202
        %v2204 = vrot.slane %v2176, %v2203
        %v2205 = vcombine.low %v2183, %v2190
        %v2206 = vcombine.low %v2197, %v2204
        %v2208 = vunpack.c.l.s4 1966171168
        %v2209 = vunpack.c.0.s8 %v2208
        %v2210 = vlaneseq
        %v2211 = vshrl.u32 %v2210, 7
        %v2212 = vsub.s32 %v2209, %v2211
        %v2213 = vrot.slane %v2205, %v2212
        %v2215 = vunpack.c.l.s4 1966171168
        %v2216 = vunpack.c.0.s8 %v2215
        %v2217 = vlaneseq
        %v2218 = vshrl.u32 %v2217, 7
        %v2219 = vsub.s32 %v2216, %v2218
        %v2220 = vrot.slane %v2206, %v2219
        %v2221 = vcombine.low %v2213, %v2220
        %v2222 = vcombine.low %v1014, %v1018
        %v2223 = vcombine.low %v1022, %v1026
        %v2224 = vcombine.low %v1030, %v1034
        %v2225 = vcombine.low %v1038, %v1042
        %v2227 = vunpack.c.l.s4 1966171168
        %v2228 = vunpack.c.0.s8 %v2227
        %v2229 = vlaneseq
        %v2230 = vshrl.u32 %v2229, 7
        %v2231 = vsub.s32 %v2228, %v2230
        %v2232 = vrot.slane %v2222, %v2231
        %v2234 = vunpack.c.l.s4 1966171168
        %v2235 = vunpack.c.0.s8 %v2234
        %v2236 = vlaneseq
        %v2237 = vshrl.u32 %v2236, 7
        %v2238 = vsub.s32 %v2235, %v2237
        %v2239 = vrot.slane %v2223, %v2238
        %v2241 = vunpack.c.l.s4 1966171168
        %v2242 = vunpack.c.0.s8 %v2241
        %v2243 = vlaneseq
        %v2244 = vshrl.u32 %v2243, 7
        %v2245 = vsub.s32 %v2242, %v2244
        %v2246 = vrot.slane %v2224, %v2245
        %v2248 = vunpack.c.l.s4 1966171168
        %v2249 = vunpack.c.0.s8 %v2248
        %v2250 = vlaneseq
        %v2251 = vshrl.u32 %v2250, 7
        %v2252 = vsub.s32 %v2249, %v2251
        %v2253 = vrot.slane %v2225, %v2252
        %v2254 = vcombine.low %v2232, %v2239
        %v2255 = vcombine.low %v2246, %v2253
        %v2257 = vunpack.c.l.s4 1966171168
        %v2258 = vunpack.c.0.s8 %v2257
        %v2259 = vlaneseq
        %v2260 = vshrl.u32 %v2259, 7
        %v2261 = vsub.s32 %v2258, %v2260
        %v2262 = vrot.slane %v2254, %v2261
        %v2264 = vunpack.c.l.s4 1966171168
        %v2265 = vunpack.c.0.s8 %v2264
        %v2266 = vlaneseq
        %v2267 = vshrl.u32 %v2266, 7
        %v2268 = vsub.s32 %v2265, %v2267
        %v2269 = vrot.slane %v2255, %v2268
        %v2270 = vcombine.low %v2262, %v2269
        %v2271 = vcombine.low %v1046, %v1050
        %v2272 = vcombine.low %v1054, %v1058
        %v2273 = vcombine.low %v1062, %v1066
        %v2274 = vcombine.low %v1070, %v1074
        %v2276 = vunpack.c.l.s4 1966171168
        %v2277 = vunpack.c.0.s8 %v2276
        %v2278 = vlaneseq
        %v2279 = vshrl.u32 %v2278, 7
        %v2280 = vsub.s32 %v2277, %v2279
        %v2281 = vrot.slane %v2271, %v2280
        %v2283 = vunpack.c.l.s4 1966171168
        %v2284 = vunpack.c.0.s8 %v2283
        %v2285 = vlaneseq
        %v2286 = vshrl.u32 %v2285, 7
        %v2287 = vsub.s32 %v2284, %v2286
        %v2288 = vrot.slane %v2272, %v2287
        %v2290 = vunpack.c.l.s4 1966171168
        %v2291 = vunpack.c.0.s8 %v2290
        %v2292 = vlaneseq
        %v2293 = vshrl.u32 %v2292, 7
        %v2294 = vsub.s32 %v2291, %v2293
        %v2295 = vrot.slane %v2273, %v2294
        %v2297 = vunpack.c.l.s4 1966171168
        %v2298 = vunpack.c.0.s8 %v2297
        %v2299 = vlaneseq
        %v2300 = vshrl.u32 %v2299, 7
        %v2301 = vsub.s32 %v2298, %v2300
        %v2302 = vrot.slane %v2274, %v2301
        %v2303 = vcombine.low %v2281, %v2288
        %v2304 = vcombine.low %v2295, %v2302
        %v2306 = vunpack.c.l.s4 1966171168
        %v2307 = vunpack.c.0.s8 %v2306
        %v2308 = vlaneseq
        %v2309 = vshrl.u32 %v2308, 7
        %v2310 = vsub.s32 %v2307, %v2309
        %v2311 = vrot.slane %v2303, %v2310
        %v2313 = vunpack.c.l.s4 1966171168
        %v2314 = vunpack.c.0.s8 %v2313
        %v2315 = vlaneseq
        %v2316 = vshrl.u32 %v2315, 7
        %v2317 = vsub.s32 %v2314, %v2316
        %v2318 = vrot.slane %v2304, %v2317
        %v2319 = vcombine.low %v2311, %v2318
        %v2320 = vcombine.low %v1078, %v1082
        %v2321 = vcombine.low %v1086, %v1090
        %v2322 = vcombine.low %v1094, %v1098
        %v2323 = vcombine.low %v1102, %v1106
        %v2325 = vunpack.c.l.s4 1966171168
        %v2326 = vunpack.c.0.s8 %v2325
        %v2327 = vlaneseq
        %v2328 = vshrl.u32 %v2327, 7
        %v2329 = vsub.s32 %v2326, %v2328
        %v2330 = vrot.slane %v2320, %v2329
        %v2332 = vunpack.c.l.s4 1966171168
        %v2333 = vunpack.c.0.s8 %v2332
        %v2334 = vlaneseq
        %v2335 = vshrl.u32 %v2334, 7
        %v2336 = vsub.s32 %v2333, %v2335
        %v2337 = vrot.slane %v2321, %v2336
        %v2339 = vunpack.c.l.s4 1966171168
        %v2340 = vunpack.c.0.s8 %v2339
        %v2341 = vlaneseq
        %v2342 = vshrl.u32 %v2341, 7
        %v2343 = vsub.s32 %v2340, %v2342
        %v2344 = vrot.slane %v2322, %v2343
        %v2346 = vunpack.c.l.s4 1966171168
        %v2347 = vunpack.c.0.s8 %v2346
        %v2348 = vlaneseq
        %v2349 = vshrl.u32 %v2348, 7
        %v2350 = vsub.s32 %v2347, %v2349
        %v2351 = vrot.slane %v2323, %v2350
        %v2352 = vcombine.low %v2330, %v2337
        %v2353 = vcombine.low %v2344, %v2351
        %v2355 = vunpack.c.l.s4 1966171168
        %v2356 = vunpack.c.0.s8 %v2355
        %v2357 = vlaneseq
        %v2358 = vshrl.u32 %v2357, 7
        %v2359 = vsub.s32 %v2356, %v2358
        %v2360 = vrot.slane %v2352, %v2359
        %v2362 = vunpack.c.l.s4 1966171168
        %v2363 = vunpack.c.0.s8 %v2362
        %v2364 = vlaneseq
        %v2365 = vshrl.u32 %v2364, 7
        %v2366 = vsub.s32 %v2363, %v2365
        %v2367 = vrot.slane %v2353, %v2366
        %v2368 = vcombine.low %v2360, %v2367
        %v2369 = vcombine.low %v1110, %v1114
        %v2370 = vcombine.low %v1118, %v1122
        %v2371 = vcombine.low %v1126, %v1130
        %v2372 = vcombine.low %v1134, %v1138
        %v2374 = vunpack.c.l.s4 1966171168
        %v2375 = vunpack.c.0.s8 %v2374
        %v2376 = vlaneseq
        %v2377 = vshrl.u32 %v2376, 7
        %v2378 = vsub.s32 %v2375, %v2377
        %v2379 = vrot.slane %v2369, %v2378
        %v2381 = vunpack.c.l.s4 1966171168
        %v2382 = vunpack.c.0.s8 %v2381
        %v2383 = vlaneseq
        %v2384 = vshrl.u32 %v2383, 7
        %v2385 = vsub.s32 %v2382, %v2384
        %v2386 = vrot.slane %v2370, %v2385
        %v2388 = vunpack.c.l.s4 1966171168
        %v2389 = vunpack.c.0.s8 %v2388
        %v2390 = vlaneseq
        %v2391 = vshrl.u32 %v2390, 7
        %v2392 = vsub.s32 %v2389, %v2391
        %v2393 = vrot.slane %v2371, %v2392
        %v2395 = vunpack.c.l.s4 1966171168
        %v2396 = vunpack.c.0.s8 %v2395
        %v2397 = vlaneseq
        %v2398 = vshrl.u32 %v2397, 7
        %v2399 = vsub.s32 %v2396, %v2398
        %v2400 = vrot.slane %v2372, %v2399
        %v2401 = vcombine.low %v2379, %v2386
        %v2402 = vcombine.low %v2393, %v2400
        %v2404 = vunpack.c.l.s4 1966171168
        %v2405 = vunpack.c.0.s8 %v2404
        %v2406 = vlaneseq
        %v2407 = vshrl.u32 %v2406, 7
        %v2408 = vsub.s32 %v2405, %v2407
        %v2409 = vrot.slane %v2401, %v2408
        %v2411 = vunpack.c.l.s4 1966171168
        %v2412 = vunpack.c.0.s8 %v2411
        %v2413 = vlaneseq
        %v2414 = vshrl.u32 %v2413, 7
        %v2415 = vsub.s32 %v2412, %v2414
        %v2416 = vrot.slane %v2402, %v2415
        %v2417 = vcombine.low %v2409, %v2416
        %v2418 = vcombine.low %v1142, %v1146
        %v2419 = vcombine.low %v1150, %v1154
        %v2420 = vcombine.low %v1158, %v1162
        %v2421 = vcombine.low %v1166, %v1170
        %v2423 = vunpack.c.l.s4 1966171168
        %v2424 = vunpack.c.0.s8 %v2423
        %v2425 = vlaneseq
        %v2426 = vshrl.u32 %v2425, 7
        %v2427 = vsub.s32 %v2424, %v2426
        %v2428 = vrot.slane %v2418, %v2427
        %v2430 = vunpack.c.l.s4 1966171168
        %v2431 = vunpack.c.0.s8 %v2430
        %v2432 = vlaneseq
        %v2433 = vshrl.u32 %v2432, 7
        %v2434 = vsub.s32 %v2431, %v2433
        %v2435 = vrot.slane %v2419, %v2434
        %v2437 = vunpack.c.l.s4 1966171168
        %v2438 = vunpack.c.0.s8 %v2437
        %v2439 = vlaneseq
        %v2440 = vshrl.u32 %v2439, 7
        %v2441 = vsub.s32 %v2438, %v2440
        %v2442 = vrot.slane %v2420, %v2441
        %v2444 = vunpack.c.l.s4 1966171168
        %v2445 = vunpack.c.0.s8 %v2444
        %v2446 = vlaneseq
        %v2447 = vshrl.u32 %v2446, 7
        %v2448 = vsub.s32 %v2445, %v2447
        %v2449 = vrot.slane %v2421, %v2448
        %v2450 = vcombine.low %v2428, %v2435
        %v2451 = vcombine.low %v2442, %v2449
        %v2453 = vunpack.c.l.s4 1966171168
        %v2454 = vunpack.c.0.s8 %v2453
        %v2455 = vlaneseq
        %v2456 = vshrl.u32 %v2455, 7
        %v2457 = vsub.s32 %v2454, %v2456
        %v2458 = vrot.slane %v2450, %v2457
        %v2460 = vunpack.c.l.s4 1966171168
        %v2461 = vunpack.c.0.s8 %v2460
        %v2462 = vlaneseq
        %v2463 = vshrl.u32 %v2462, 7
        %v2464 = vsub.s32 %v2461, %v2463
        %v2465 = vrot.slane %v2451, %v2464
        %v2466 = vcombine.low %v2458, %v2465
        %v2467 = vcombine.low %v1174, %v1178
        %v2468 = vcombine.low %v1182, %v1186
        %v2469 = vcombine.low %v1190, %v1194
        %v2470 = vcombine.low %v1198, %v1202
        %v2472 = vunpack.c.l.s4 1966171168
        %v2473 = vunpack.c.0.s8 %v2472
        %v2474 = vlaneseq
        %v2475 = vshrl.u32 %v2474, 7
        %v2476 = vsub.s32 %v2473, %v2475
        %v2477 = vrot.slane %v2467, %v2476
        %v2479 = vunpack.c.l.s4 1966171168
        %v2480 = vunpack.c.0.s8 %v2479
        %v2481 = vlaneseq
        %v2482 = vshrl.u32 %v2481, 7
        %v2483 = vsub.s32 %v2480, %v2482
        %v2484 = vrot.slane %v2468, %v2483
        %v2486 = vunpack.c.l.s4 1966171168
        %v2487 = vunpack.c.0.s8 %v2486
        %v2488 = vlaneseq
        %v2489 = vshrl.u32 %v2488, 7
        %v2490 = vsub.s32 %v2487, %v2489
        %v2491 = vrot.slane %v2469, %v2490
        %v2493 = vunpack.c.l.s4 1966171168
        %v2494 = vunpack.c.0.s8 %v2493
        %v2495 = vlaneseq
        %v2496 = vshrl.u32 %v2495, 7
        %v2497 = vsub.s32 %v2494, %v2496
        %v2498 = vrot.slane %v2470, %v2497
        %v2499 = vcombine.low %v2477, %v2484
        %v2500 = vcombine.low %v2491, %v2498
        %v2502 = vunpack.c.l.s4 1966171168
        %v2503 = vunpack.c.0.s8 %v2502
        %v2504 = vlaneseq
        %v2505 = vshrl.u32 %v2504, 7
        %v2506 = vsub.s32 %v2503, %v2505
        %v2507 = vrot.slane %v2499, %v2506
        %v2509 = vunpack.c.l.s4 1966171168
        %v2510 = vunpack.c.0.s8 %v2509
        %v2511 = vlaneseq
        %v2512 = vshrl.u32 %v2511, 7
        %v2513 = vsub.s32 %v2510, %v2512
        %v2514 = vrot.slane %v2500, %v2513
        %v2515 = vcombine.low %v2507, %v2514
        %v2516 = vcombine.low %v1206, %v1210
        %v2517 = vcombine.low %v1214, %v1218
        %v2518 = vcombine.low %v1222, %v1226
        %v2519 = vcombine.low %v1230, %v1234
        %v2521 = vunpack.c.l.s4 1966171168
        %v2522 = vunpack.c.0.s8 %v2521
        %v2523 = vlaneseq
        %v2524 = vshrl.u32 %v2523, 7
        %v2525 = vsub.s32 %v2522, %v2524
        %v2526 = vrot.slane %v2516, %v2525
        %v2528 = vunpack.c.l.s4 1966171168
        %v2529 = vunpack.c.0.s8 %v2528
        %v2530 = vlaneseq
        %v2531 = vshrl.u32 %v2530, 7
        %v2532 = vsub.s32 %v2529, %v2531
        %v2533 = vrot.slane %v2517, %v2532
        %v2535 = vunpack.c.l.s4 1966171168
        %v2536 = vunpack.c.0.s8 %v2535
        %v2537 = vlaneseq
        %v2538 = vshrl.u32 %v2537, 7
        %v2539 = vsub.s32 %v2536, %v2538
        %v2540 = vrot.slane %v2518, %v2539
        %v2542 = vunpack.c.l.s4 1966171168
        %v2543 = vunpack.c.0.s8 %v2542
        %v2544 = vlaneseq
        %v2545 = vshrl.u32 %v2544, 7
        %v2546 = vsub.s32 %v2543, %v2545
        %v2547 = vrot.slane %v2519, %v2546
        %v2548 = vcombine.low %v2526, %v2533
        %v2549 = vcombine.low %v2540, %v2547
        %v2551 = vunpack.c.l.s4 1966171168
        %v2552 = vunpack.c.0.s8 %v2551
        %v2553 = vlaneseq
        %v2554 = vshrl.u32 %v2553, 7
        %v2555 = vsub.s32 %v2552, %v2554
        %v2556 = vrot.slane %v2548, %v2555
        %v2558 = vunpack.c.l.s4 1966171168
        %v2559 = vunpack.c.0.s8 %v2558
        %v2560 = vlaneseq
        %v2561 = vshrl.u32 %v2560, 7
        %v2562 = vsub.s32 %v2559, %v2561
        %v2563 = vrot.slane %v2549, %v2562
        %v2564 = vcombine.low %v2556, %v2563
        %v2565 = vcombine.low %v1238, %v1242
        %v2566 = vcombine.low %v1246, %v1250
        %v2567 = vcombine.low %v1254, %v1258
        %v2568 = vcombine.low %v1262, %v1266
        %v2570 = vunpack.c.l.s4 1966171168
        %v2571 = vunpack.c.0.s8 %v2570
        %v2572 = vlaneseq
        %v2573 = vshrl.u32 %v2572, 7
        %v2574 = vsub.s32 %v2571, %v2573
        %v2575 = vrot.slane %v2565, %v2574
        %v2577 = vunpack.c.l.s4 1966171168
        %v2578 = vunpack.c.0.s8 %v2577
        %v2579 = vlaneseq
        %v2580 = vshrl.u32 %v2579, 7
        %v2581 = vsub.s32 %v2578, %v2580
        %v2582 = vrot.slane %v2566, %v2581
        %v2584 = vunpack.c.l.s4 1966171168
        %v2585 = vunpack.c.0.s8 %v2584
        %v2586 = vlaneseq
        %v2587 = vshrl.u32 %v2586, 7
        %v2588 = vsub.s32 %v2585, %v2587
        %v2589 = vrot.slane %v2567, %v2588
        %v2591 = vunpack.c.l.s4 1966171168
        %v2592 = vunpack.c.0.s8 %v2591
        %v2593 = vlaneseq
        %v2594 = vshrl.u32 %v2593, 7
        %v2595 = vsub.s32 %v2592, %v2594
        %v2596 = vrot.slane %v2568, %v2595
        %v2597 = vcombine.low %v2575, %v2582
        %v2598 = vcombine.low %v2589, %v2596
        %v2600 = vunpack.c.l.s4 1966171168
        %v2601 = vunpack.c.0.s8 %v2600
        %v2602 = vlaneseq
        %v2603 = vshrl.u32 %v2602, 7
        %v2604 = vsub.s32 %v2601, %v2603
        %v2605 = vrot.slane %v2597, %v2604
        %v2607 = vunpack.c.l.s4 1966171168
        %v2608 = vunpack.c.0.s8 %v2607
        %v2609 = vlaneseq
        %v2610 = vshrl.u32 %v2609, 7
        %v2611 = vsub.s32 %v2608, %v2610
        %v2612 = vrot.slane %v2598, %v2611
        %v2613 = vcombine.low %v2605, %v2612
        %v2614 = vcombine.low %v1270, %v1274
        %v2615 = vcombine.low %v1278, %v1282
        %v2616 = vcombine.low %v1286, %v1290
        %v2617 = vcombine.low %v1294, %v1298
        %v2619 = vunpack.c.l.s4 1966171168
        %v2620 = vunpack.c.0.s8 %v2619
        %v2621 = vlaneseq
        %v2622 = vshrl.u32 %v2621, 7
        %v2623 = vsub.s32 %v2620, %v2622
        %v2624 = vrot.slane %v2614, %v2623
        %v2626 = vunpack.c.l.s4 1966171168
        %v2627 = vunpack.c.0.s8 %v2626
        %v2628 = vlaneseq
        %v2629 = vshrl.u32 %v2628, 7
        %v2630 = vsub.s32 %v2627, %v2629
        %v2631 = vrot.slane %v2615, %v2630
        %v2633 = vunpack.c.l.s4 1966171168
        %v2634 = vunpack.c.0.s8 %v2633
        %v2635 = vlaneseq
        %v2636 = vshrl.u32 %v2635, 7
        %v2637 = vsub.s32 %v2634, %v2636
        %v2638 = vrot.slane %v2616, %v2637
        %v2640 = vunpack.c.l.s4 1966171168
        %v2641 = vunpack.c.0.s8 %v2640
        %v2642 = vlaneseq
        %v2643 = vshrl.u32 %v2642, 7
        %v2644 = vsub.s32 %v2641, %v2643
        %v2645 = vrot.slane %v2617, %v2644
        %v2646 = vcombine.low %v2624, %v2631
        %v2647 = vcombine.low %v2638, %v2645
        %v2649 = vunpack.c.l.s4 1966171168
        %v2650 = vunpack.c.0.s8 %v2649
        %v2651 = vlaneseq
        %v2652 = vshrl.u32 %v2651, 7
        %v2653 = vsub.s32 %v2650, %v2652
        %v2654 = vrot.slane %v2646, %v2653
        %v2656 = vunpack.c.l.s4 1966171168
        %v2657 = vunpack.c.0.s8 %v2656
        %v2658 = vlaneseq
        %v2659 = vshrl.u32 %v2658, 7
        %v2660 = vsub.s32 %v2657, %v2659
        %v2661 = vrot.slane %v2647, %v2660
        %v2662 = vcombine.low %v2654, %v2661
        %v2663 = vcombine.low %v1302, %v1306
        %v2664 = vcombine.low %v1310, %v1314
        %v2665 = vcombine.low %v1318, %v1322
        %v2666 = vcombine.low %v1326, %v1330
        %v2668 = vunpack.c.l.s4 1966171168
        %v2669 = vunpack.c.0.s8 %v2668
        %v2670 = vlaneseq
        %v2671 = vshrl.u32 %v2670, 7
        %v2672 = vsub.s32 %v2669, %v2671
        %v2673 = vrot.slane %v2663, %v2672
        %v2675 = vunpack.c.l.s4 1966171168
        %v2676 = vunpack.c.0.s8 %v2675
        %v2677 = vlaneseq
        %v2678 = vshrl.u32 %v2677, 7
        %v2679 = vsub.s32 %v2676, %v2678
        %v2680 = vrot.slane %v2664, %v2679
        %v2682 = vunpack.c.l.s4 1966171168
        %v2683 = vunpack.c.0.s8 %v2682
        %v2684 = vlaneseq
        %v2685 = vshrl.u32 %v2684, 7
        %v2686 = vsub.s32 %v2683, %v2685
        %v2687 = vrot.slane %v2665, %v2686
        %v2689 = vunpack.c.l.s4 1966171168
        %v2690 = vunpack.c.0.s8 %v2689
        %v2691 = vlaneseq
        %v2692 = vshrl.u32 %v2691, 7
        %v2693 = vsub.s32 %v2690, %v2692
        %v2694 = vrot.slane %v2666, %v2693
        %v2695 = vcombine.low %v2673, %v2680
        %v2696 = vcombine.low %v2687, %v2694
        %v2698 = vunpack.c.l.s4 1966171168
        %v2699 = vunpack.c.0.s8 %v2698
        %v2700 = vlaneseq
        %v2701 = vshrl.u32 %v2700, 7
        %v2702 = vsub.s32 %v2699, %v2701
        %v2703 = vrot.slane %v2695, %v2702
        %v2705 = vunpack.c.l.s4 1966171168
        %v2706 = vunpack.c.0.s8 %v2705
        %v2707 = vlaneseq
        %v2708 = vshrl.u32 %v2707, 7
        %v2709 = vsub.s32 %v2706, %v2708
        %v2710 = vrot.slane %v2696, %v2709
        %v2711 = vcombine.low %v2703, %v2710
        %v2712 = vcombine.low %v1334, %v1338
        %v2713 = vcombine.low %v1342, %v1346
        %v2714 = vcombine.low %v1350, %v1354
        %v2715 = vcombine.low %v1358, %v1362
        %v2717 = vunpack.c.l.s4 1966171168
        %v2718 = vunpack.c.0.s8 %v2717
        %v2719 = vlaneseq
        %v2720 = vshrl.u32 %v2719, 7
        %v2721 = vsub.s32 %v2718, %v2720
        %v2722 = vrot.slane %v2712, %v2721
        %v2724 = vunpack.c.l.s4 1966171168
        %v2725 = vunpack.c.0.s8 %v2724
        %v2726 = vlaneseq
        %v2727 = vshrl.u32 %v2726, 7
        %v2728 = vsub.s32 %v2725, %v2727
        %v2729 = vrot.slane %v2713, %v2728
        %v2731 = vunpack.c.l.s4 1966171168
        %v2732 = vunpack.c.0.s8 %v2731
        %v2733 = vlaneseq
        %v2734 = vshrl.u32 %v2733, 7
        %v2735 = vsub.s32 %v2732, %v2734
        %v2736 = vrot.slane %v2714, %v2735
        %v2738 = vunpack.c.l.s4 1966171168
        %v2739 = vunpack.c.0.s8 %v2738
        %v2740 = vlaneseq
        %v2741 = vshrl.u32 %v2740, 7
        %v2742 = vsub.s32 %v2739, %v2741
        %v2743 = vrot.slane %v2715, %v2742
        %v2744 = vcombine.low %v2722, %v2729
        %v2745 = vcombine.low %v2736, %v2743
        %v2747 = vunpack.c.l.s4 1966171168
        %v2748 = vunpack.c.0.s8 %v2747
        %v2749 = vlaneseq
        %v2750 = vshrl.u32 %v2749, 7
        %v2751 = vsub.s32 %v2748, %v2750
        %v2752 = vrot.slane %v2744, %v2751
        %v2754 = vunpack.c.l.s4 1966171168
        %v2755 = vunpack.c.0.s8 %v2754
        %v2756 = vlaneseq
        %v2757 = vshrl.u32 %v2756, 7
        %v2758 = vsub.s32 %v2755, %v2757
        %v2759 = vrot.slane %v2745, %v2758
        %v2760 = vcombine.low %v2752, %v2759
        %v2761 = vcombine.low %v1366, %v1370
        %v2762 = vcombine.low %v1374, %v1378
        %v2763 = vcombine.low %v1382, %v1386
        %v2764 = vcombine.low %v1390, %v1394
        %v2766 = vunpack.c.l.s4 1966171168
        %v2767 = vunpack.c.0.s8 %v2766
        %v2768 = vlaneseq
        %v2769 = vshrl.u32 %v2768, 7
        %v2770 = vsub.s32 %v2767, %v2769
        %v2771 = vrot.slane %v2761, %v2770
        %v2773 = vunpack.c.l.s4 1966171168
        %v2774 = vunpack.c.0.s8 %v2773
        %v2775 = vlaneseq
        %v2776 = vshrl.u32 %v2775, 7
        %v2777 = vsub.s32 %v2774, %v2776
        %v2778 = vrot.slane %v2762, %v2777
        %v2780 = vunpack.c.l.s4 1966171168
        %v2781 = vunpack.c.0.s8 %v2780
        %v2782 = vlaneseq
        %v2783 = vshrl.u32 %v2782, 7
        %v2784 = vsub.s32 %v2781, %v2783
        %v2785 = vrot.slane %v2763, %v2784
        %v2787 = vunpack.c.l.s4 1966171168
        %v2788 = vunpack.c.0.s8 %v2787
        %v2789 = vlaneseq
        %v2790 = vshrl.u32 %v2789, 7
        %v2791 = vsub.s32 %v2788, %v2790
        %v2792 = vrot.slane %v2764, %v2791
        %v2793 = vcombine.low %v2771, %v2778
        %v2794 = vcombine.low %v2785, %v2792
        %v2796 = vunpack.c.l.s4 1966171168
        %v2797 = vunpack.c.0.s8 %v2796
        %v2798 = vlaneseq
        %v2799 = vshrl.u32 %v2798, 7
        %v2800 = vsub.s32 %v2797, %v2799
        %v2801 = vrot.slane %v2793, %v2800
        %v2803 = vunpack.c.l.s4 1966171168
        %v2804 = vunpack.c.0.s8 %v2803
        %v2805 = vlaneseq
        %v2806 = vshrl.u32 %v2805, 7
        %v2807 = vsub.s32 %v2804, %v2806
        %v2808 = vrot.slane %v2794, %v2807
        %v2809 = vcombine.low %v2801, %v2808
        %v2810 = vcombine.low %v1398, %v1402
        %v2811 = vcombine.low %v1406, %v1410
        %v2812 = vcombine.low %v1414, %v1418
        %v2813 = vcombine.low %v1422, %v1426
        %v2815 = vunpack.c.l.s4 1966171168
        %v2816 = vunpack.c.0.s8 %v2815
        %v2817 = vlaneseq
        %v2818 = vshrl.u32 %v2817, 7
        %v2819 = vsub.s32 %v2816, %v2818
        %v2820 = vrot.slane %v2810, %v2819
        %v2822 = vunpack.c.l.s4 1966171168
        %v2823 = vunpack.c.0.s8 %v2822
        %v2824 = vlaneseq
        %v2825 = vshrl.u32 %v2824, 7
        %v2826 = vsub.s32 %v2823, %v2825
        %v2827 = vrot.slane %v2811, %v2826
        %v2829 = vunpack.c.l.s4 1966171168
        %v2830 = vunpack.c.0.s8 %v2829
        %v2831 = vlaneseq
        %v2832 = vshrl.u32 %v2831, 7
        %v2833 = vsub.s32 %v2830, %v2832
        %v2834 = vrot.slane %v2812, %v2833
        %v2836 = vunpack.c.l.s4 1966171168
        %v2837 = vunpack.c.0.s8 %v2836
        %v2838 = vlaneseq
        %v2839 = vshrl.u32 %v2838, 7
        %v2840 = vsub.s32 %v2837, %v2839
        %v2841 = vrot.slane %v2813, %v2840
        %v2842 = vcombine.low %v2820, %v2827
        %v2843 = vcombine.low %v2834, %v2841
        %v2845 = vunpack.c.l.s4 1966171168
        %v2846 = vunpack.c.0.s8 %v2845
        %v2847 = vlaneseq
        %v2848 = vshrl.u32 %v2847, 7
        %v2849 = vsub.s32 %v2846, %v2848
        %v2850 = vrot.slane %v2842, %v2849
        %v2852 = vunpack.c.l.s4 1966171168
        %v2853 = vunpack.c.0.s8 %v2852
        %v2854 = vlaneseq
        %v2855 = vshrl.u32 %v2854, 7
        %v2856 = vsub.s32 %v2853, %v2855
        %v2857 = vrot.slane %v2843, %v2856
        %v2858 = vcombine.low %v2850, %v2857
        %v2859 = vcombine.low %v1430, %v1434
        %v2860 = vcombine.low %v1438, %v1442
        %v2861 = vcombine.low %v1446, %v1450
        %v2862 = vcombine.low %v1454, %v1458
        %v2864 = vunpack.c.l.s4 1966171168
        %v2865 = vunpack.c.0.s8 %v2864
        %v2866 = vlaneseq
        %v2867 = vshrl.u32 %v2866, 7
        %v2868 = vsub.s32 %v2865, %v2867
        %v2869 = vrot.slane %v2859, %v2868
        %v2871 = vunpack.c.l.s4 1966171168
        %v2872 = vunpack.c.0.s8 %v2871
        %v2873 = vlaneseq
        %v2874 = vshrl.u32 %v2873, 7
        %v2875 = vsub.s32 %v2872, %v2874
        %v2876 = vrot.slane %v2860, %v2875
        %v2878 = vunpack.c.l.s4 1966171168
        %v2879 = vunpack.c.0.s8 %v2878
        %v2880 = vlaneseq
        %v2881 = vshrl.u32 %v2880, 7
        %v2882 = vsub.s32 %v2879, %v2881
        %v2883 = vrot.slane %v2861, %v2882
        %v2885 = vunpack.c.l.s4 1966171168
        %v2886 = vunpack.c.0.s8 %v2885
        %v2887 = vlaneseq
        %v2888 = vshrl.u32 %v2887, 7
        %v2889 = vsub.s32 %v2886, %v2888
        %v2890 = vrot.slane %v2862, %v2889
        %v2891 = vcombine.low %v2869, %v2876
        %v2892 = vcombine.low %v2883, %v2890
        %v2894 = vunpack.c.l.s4 1966171168
        %v2895 = vunpack.c.0.s8 %v2894
        %v2896 = vlaneseq
        %v2897 = vshrl.u32 %v2896, 7
        %v2898 = vsub.s32 %v2895, %v2897
        %v2899 = vrot.slane %v2891, %v2898
        %v2901 = vunpack.c.l.s4 1966171168
        %v2902 = vunpack.c.0.s8 %v2901
        %v2903 = vlaneseq
        %v2904 = vshrl.u32 %v2903, 7
        %v2905 = vsub.s32 %v2902, %v2904
        %v2906 = vrot.slane %v2892, %v2905
        %v2907 = vcombine.low %v2899, %v2906
        %v2908 = vcombine.low %v1462, %v1466
        %v2909 = vcombine.low %v1470, %v1474
        %v2910 = vcombine.low %v1478, %v1482
        %v2911 = vcombine.low %v1486, %v1490
        %v2913 = vunpack.c.l.s4 1966171168
        %v2914 = vunpack.c.0.s8 %v2913
        %v2915 = vlaneseq
        %v2916 = vshrl.u32 %v2915, 7
        %v2917 = vsub.s32 %v2914, %v2916
        %v2918 = vrot.slane %v2908, %v2917
        %v2920 = vunpack.c.l.s4 1966171168
        %v2921 = vunpack.c.0.s8 %v2920
        %v2922 = vlaneseq
        %v2923 = vshrl.u32 %v2922, 7
        %v2924 = vsub.s32 %v2921, %v2923
        %v2925 = vrot.slane %v2909, %v2924
        %v2927 = vunpack.c.l.s4 1966171168
        %v2928 = vunpack.c.0.s8 %v2927
        %v2929 = vlaneseq
        %v2930 = vshrl.u32 %v2929, 7
        %v2931 = vsub.s32 %v2928, %v2930
        %v2932 = vrot.slane %v2910, %v2931
        %v2934 = vunpack.c.l.s4 1966171168
        %v2935 = vunpack.c.0.s8 %v2934
        %v2936 = vlaneseq
        %v2937 = vshrl.u32 %v2936, 7
        %v2938 = vsub.s32 %v2935, %v2937
        %v2939 = vrot.slane %v2911, %v2938
        %v2940 = vcombine.low %v2918, %v2925
        %v2941 = vcombine.low %v2932, %v2939
        %v2943 = vunpack.c.l.s4 1966171168
        %v2944 = vunpack.c.0.s8 %v2943
        %v2945 = vlaneseq
        %v2946 = vshrl.u32 %v2945, 7
        %v2947 = vsub.s32 %v2944, %v2946
        %v2948 = vrot.slane %v2940, %v2947
        %v2950 = vunpack.c.l.s4 1966171168
        %v2951 = vunpack.c.0.s8 %v2950
        %v2952 = vlaneseq
        %v2953 = vshrl.u32 %v2952, 7
        %v2954 = vsub.s32 %v2951, %v2953
        %v2955 = vrot.slane %v2941, %v2954
        %v2956 = vcombine.low %v2948, %v2955
        %v2957 = vcombine.low %v1494, %v1498
        %v2958 = vcombine.low %v1502, %v1506
        %v2959 = vcombine.low %v1510, %v1514
        %v2960 = vcombine.low %v1518, %v1522
        %v2962 = vunpack.c.l.s4 1966171168
        %v2963 = vunpack.c.0.s8 %v2962
        %v2964 = vlaneseq
        %v2965 = vshrl.u32 %v2964, 7
        %v2966 = vsub.s32 %v2963, %v2965
        %v2967 = vrot.slane %v2957, %v2966
        %v2969 = vunpack.c.l.s4 1966171168
        %v2970 = vunpack.c.0.s8 %v2969
        %v2971 = vlaneseq
        %v2972 = vshrl.u32 %v2971, 7
        %v2973 = vsub.s32 %v2970, %v2972
        %v2974 = vrot.slane %v2958, %v2973
        %v2976 = vunpack.c.l.s4 1966171168
        %v2977 = vunpack.c.0.s8 %v2976
        %v2978 = vlaneseq
        %v2979 = vshrl.u32 %v2978, 7
        %v2980 = vsub.s32 %v2977, %v2979
        %v2981 = vrot.slane %v2959, %v2980
        %v2983 = vunpack.c.l.s4 1966171168
        %v2984 = vunpack.c.0.s8 %v2983
        %v2985 = vlaneseq
        %v2986 = vshrl.u32 %v2985, 7
        %v2987 = vsub.s32 %v2984, %v2986
        %v2988 = vrot.slane %v2960, %v2987
        %v2989 = vcombine.low %v2967, %v2974
        %v2990 = vcombine.low %v2981, %v2988
        %v2992 = vunpack.c.l.s4 1966171168
        %v2993 = vunpack.c.0.s8 %v2992
        %v2994 = vlaneseq
        %v2995 = vshrl.u32 %v2994, 7
        %v2996 = vsub.s32 %v2993, %v2995
        %v2997 = vrot.slane %v2989, %v2996
        %v2999 = vunpack.c.l.s4 1966171168
        %v3000 = vunpack.c.0.s8 %v2999
        %v3001 = vlaneseq
        %v3002 = vshrl.u32 %v3001, 7
        %v3003 = vsub.s32 %v3000, %v3002
        %v3004 = vrot.slane %v2990, %v3003
        %v3005 = vcombine.low %v2997, %v3004
        %v3006 = vcombine.low %v1526, %v1530
        %v3007 = vcombine.low %v1534, %v1538
        %v3008 = vcombine.low %v1542, %v1546
        %v3009 = vcombine.low %v1550, %v1554
        %v3011 = vunpack.c.l.s4 1966171168
        %v3012 = vunpack.c.0.s8 %v3011
        %v3013 = vlaneseq
        %v3014 = vshrl.u32 %v3013, 7
        %v3015 = vsub.s32 %v3012, %v3014
        %v3016 = vrot.slane %v3006, %v3015
        %v3018 = vunpack.c.l.s4 1966171168
        %v3019 = vunpack.c.0.s8 %v3018
        %v3020 = vlaneseq
        %v3021 = vshrl.u32 %v3020, 7
        %v3022 = vsub.s32 %v3019, %v3021
        %v3023 = vrot.slane %v3007, %v3022
        %v3025 = vunpack.c.l.s4 1966171168
        %v3026 = vunpack.c.0.s8 %v3025
        %v3027 = vlaneseq
        %v3028 = vshrl.u32 %v3027, 7
        %v3029 = vsub.s32 %v3026, %v3028
        %v3030 = vrot.slane %v3008, %v3029
        %v3032 = vunpack.c.l.s4 1966171168
        %v3033 = vunpack.c.0.s8 %v3032
        %v3034 = vlaneseq
        %v3035 = vshrl.u32 %v3034, 7
        %v3036 = vsub.s32 %v3033, %v3035
        %v3037 = vrot.slane %v3009, %v3036
        %v3038 = vcombine.low %v3016, %v3023
        %v3039 = vcombine.low %v3030, %v3037
        %v3041 = vunpack.c.l.s4 1966171168
        %v3042 = vunpack.c.0.s8 %v3041
        %v3043 = vlaneseq
        %v3044 = vshrl.u32 %v3043, 7
        %v3045 = vsub.s32 %v3042, %v3044
        %v3046 = vrot.slane %v3038, %v3045
        %v3048 = vunpack.c.l.s4 1966171168
        %v3049 = vunpack.c.0.s8 %v3048
        %v3050 = vlaneseq
        %v3051 = vshrl.u32 %v3050, 7
        %v3052 = vsub.s32 %v3049, %v3051
        %v3053 = vrot.slane %v3039, %v3052
        %v3054 = vcombine.low %v3046, %v3053
        %v3055 = vcombine.low %v1558, %v1562
        %v3056 = vcombine.low %v1566, %v1570
        %v3057 = vcombine.low %v1574, %v1578
        %v3058 = vcombine.low %v1582, %v1586
        %v3060 = vunpack.c.l.s4 1966171168
        %v3061 = vunpack.c.0.s8 %v3060
        %v3062 = vlaneseq
        %v3063 = vshrl.u32 %v3062, 7
        %v3064 = vsub.s32 %v3061, %v3063
        %v3065 = vrot.slane %v3055, %v3064
        %v3067 = vunpack.c.l.s4 1966171168
        %v3068 = vunpack.c.0.s8 %v3067
        %v3069 = vlaneseq
        %v3070 = vshrl.u32 %v3069, 7
        %v3071 = vsub.s32 %v3068, %v3070
        %v3072 = vrot.slane %v3056, %v3071
        %v3074 = vunpack.c.l.s4 1966171168
        %v3075 = vunpack.c.0.s8 %v3074
        %v3076 = vlaneseq
        %v3077 = vshrl.u32 %v3076, 7
        %v3078 = vsub.s32 %v3075, %v3077
        %v3079 = vrot.slane %v3057, %v3078
        %v3081 = vunpack.c.l.s4 1966171168
        %v3082 = vunpack.c.0.s8 %v3081
        %v3083 = vlaneseq
        %v3084 = vshrl.u32 %v3083, 7
        %v3085 = vsub.s32 %v3082, %v3084
        %v3086 = vrot.slane %v3058, %v3085
        %v3087 = vcombine.low %v3065, %v3072
        %v3088 = vcombine.low %v3079, %v3086
        %v3090 = vunpack.c.l.s4 1966171168
        %v3091 = vunpack.c.0.s8 %v3090
        %v3092 = vlaneseq
        %v3093 = vshrl.u32 %v3092, 7
        %v3094 = vsub.s32 %v3091, %v3093
        %v3095 = vrot.slane %v3087, %v3094
        %v3097 = vunpack.c.l.s4 1966171168
        %v3098 = vunpack.c.0.s8 %v3097
        %v3099 = vlaneseq
        %v3100 = vshrl.u32 %v3099, 7
        %v3101 = vsub.s32 %v3098, %v3100
        %v3102 = vrot.slane %v3088, %v3101
        %v3103 = vcombine.low %v3095, %v3102
        %v3104 = vcombine.low %v1590, %v1594
        %v3105 = vcombine.low %v1598, %v1602
        %v3106 = vcombine.low %v1606, %v1610
        %v3107 = vcombine.low %v1614, %v1618
        %v3109 = vunpack.c.l.s4 1966171168
        %v3110 = vunpack.c.0.s8 %v3109
        %v3111 = vlaneseq
        %v3112 = vshrl.u32 %v3111, 7
        %v3113 = vsub.s32 %v3110, %v3112
        %v3114 = vrot.slane %v3104, %v3113
        %v3116 = vunpack.c.l.s4 1966171168
        %v3117 = vunpack.c.0.s8 %v3116
        %v3118 = vlaneseq
        %v3119 = vshrl.u32 %v3118, 7
        %v3120 = vsub.s32 %v3117, %v3119
        %v3121 = vrot.slane %v3105, %v3120
        %v3123 = vunpack.c.l.s4 1966171168
        %v3124 = vunpack.c.0.s8 %v3123
        %v3125 = vlaneseq
        %v3126 = vshrl.u32 %v3125, 7
        %v3127 = vsub.s32 %v3124, %v3126
        %v3128 = vrot.slane %v3106, %v3127
        %v3130 = vunpack.c.l.s4 1966171168
        %v3131 = vunpack.c.0.s8 %v3130
        %v3132 = vlaneseq
        %v3133 = vshrl.u32 %v3132, 7
        %v3134 = vsub.s32 %v3131, %v3133
        %v3135 = vrot.slane %v3107, %v3134
        %v3136 = vcombine.low %v3114, %v3121
        %v3137 = vcombine.low %v3128, %v3135
        %v3139 = vunpack.c.l.s4 1966171168
        %v3140 = vunpack.c.0.s8 %v3139
        %v3141 = vlaneseq
        %v3142 = vshrl.u32 %v3141, 7
        %v3143 = vsub.s32 %v3140, %v3142
        %v3144 = vrot.slane %v3136, %v3143
        %v3146 = vunpack.c.l.s4 1966171168
        %v3147 = vunpack.c.0.s8 %v3146
        %v3148 = vlaneseq
        %v3149 = vshrl.u32 %v3148, 7
        %v3150 = vsub.s32 %v3147, %v3149
        %v3151 = vrot.slane %v3137, %v3150
        %v3152 = vcombine.low %v3144, %v3151
        %v3153 = vcombine.low %v1622, %v1626
        %v3154 = vcombine.low %v1630, %v1634
        %v3155 = vcombine.low %v1638, %v1642
        %v3156 = vcombine.low %v1646, %v1650
        %v3158 = vunpack.c.l.s4 1966171168
        %v3159 = vunpack.c.0.s8 %v3158
        %v3160 = vlaneseq
        %v3161 = vshrl.u32 %v3160, 7
        %v3162 = vsub.s32 %v3159, %v3161
        %v3163 = vrot.slane %v3153, %v3162
        %v3165 = vunpack.c.l.s4 1966171168
        %v3166 = vunpack.c.0.s8 %v3165
        %v3167 = vlaneseq
        %v3168 = vshrl.u32 %v3167, 7
        %v3169 = vsub.s32 %v3166, %v3168
        %v3170 = vrot.slane %v3154, %v3169
        %v3172 = vunpack.c.l.s4 1966171168
        %v3173 = vunpack.c.0.s8 %v3172
        %v3174 = vlaneseq
        %v3175 = vshrl.u32 %v3174, 7
        %v3176 = vsub.s32 %v3173, %v3175
        %v3177 = vrot.slane %v3155, %v3176
        %v3179 = vunpack.c.l.s4 1966171168
        %v3180 = vunpack.c.0.s8 %v3179
        %v3181 = vlaneseq
        %v3182 = vshrl.u32 %v3181, 7
        %v3183 = vsub.s32 %v3180, %v3182
        %v3184 = vrot.slane %v3156, %v3183
        %v3185 = vcombine.low %v3163, %v3170
        %v3186 = vcombine.low %v3177, %v3184
        %v3188 = vunpack.c.l.s4 1966171168
        %v3189 = vunpack.c.0.s8 %v3188
        %v3190 = vlaneseq
        %v3191 = vshrl.u32 %v3190, 7
        %v3192 = vsub.s32 %v3189, %v3191
        %v3193 = vrot.slane %v3185, %v3192
        %v3195 = vunpack.c.l.s4 1966171168
        %v3196 = vunpack.c.0.s8 %v3195
        %v3197 = vlaneseq
        %v3198 = vshrl.u32 %v3197, 7
        %v3199 = vsub.s32 %v3196, %v3198
        %v3200 = vrot.slane %v3186, %v3199
        %v3201 = vcombine.low %v3193, %v3200
        %v3202 = vcombine.low %v1654, %v1658
        %v3203 = vcombine.low %v1662, %v1666
        %v3204 = vcombine.low %v1670, %v1674
        %v3205 = vcombine.low %v1678, %v1682
        %v3207 = vunpack.c.l.s4 1966171168
        %v3208 = vunpack.c.0.s8 %v3207
        %v3209 = vlaneseq
        %v3210 = vshrl.u32 %v3209, 7
        %v3211 = vsub.s32 %v3208, %v3210
        %v3212 = vrot.slane %v3202, %v3211
        %v3214 = vunpack.c.l.s4 1966171168
        %v3215 = vunpack.c.0.s8 %v3214
        %v3216 = vlaneseq
        %v3217 = vshrl.u32 %v3216, 7
        %v3218 = vsub.s32 %v3215, %v3217
        %v3219 = vrot.slane %v3203, %v3218
        %v3221 = vunpack.c.l.s4 1966171168
        %v3222 = vunpack.c.0.s8 %v3221
        %v3223 = vlaneseq
        %v3224 = vshrl.u32 %v3223, 7
        %v3225 = vsub.s32 %v3222, %v3224
        %v3226 = vrot.slane %v3204, %v3225
        %v3228 = vunpack.c.l.s4 1966171168
        %v3229 = vunpack.c.0.s8 %v3228
        %v3230 = vlaneseq
        %v3231 = vshrl.u32 %v3230, 7
        %v3232 = vsub.s32 %v3229, %v3231
        %v3233 = vrot.slane %v3205, %v3232
        %v3234 = vcombine.low %v3212, %v3219
        %v3235 = vcombine.low %v3226, %v3233
        %v3237 = vunpack.c.l.s4 1966171168
        %v3238 = vunpack.c.0.s8 %v3237
        %v3239 = vlaneseq
        %v3240 = vshrl.u32 %v3239, 7
        %v3241 = vsub.s32 %v3238, %v3240
        %v3242 = vrot.slane %v3234, %v3241
        %v3244 = vunpack.c.l.s4 1966171168
        %v3245 = vunpack.c.0.s8 %v3244
        %v3246 = vlaneseq
        %v3247 = vshrl.u32 %v3246, 7
        %v3248 = vsub.s32 %v3245, %v3247
        %v3249 = vrot.slane %v3235, %v3248
        %v3250 = vcombine.low %v3242, %v3249
        %3251 = vset.pattern.permute.xlu0 0
        %3252 = vperm.xlu0 %3251, %v1731
        %v3253 = vpop.permute.xlu0 %3252
        %3254 = vset.pattern.permute.xlu0 0
        %3255 = vperm.xlu0 %3254, %v1780
        %v3256 = vpop.permute.xlu0 %3255
        %3257 = vset.pattern.permute.xlu0 0
        %3258 = vperm.xlu0 %3257, %v1829
        %v3259 = vpop.permute.xlu0 %3258
        %3260 = vset.pattern.permute.xlu0 0
        %3261 = vperm.xlu0 %3260, %v1878
        %v3262 = vpop.permute.xlu0 %3261
        %3263 = vset.pattern.permute.xlu0 0
        %3264 = vperm.xlu0 %3263, %v1927
        %v3265 = vpop.permute.xlu0 %3264
        %3266 = vset.pattern.permute.xlu0 0
        %3267 = vperm.xlu0 %3266, %v1976
        %v3268 = vpop.permute.xlu0 %3267
        %3269 = vset.pattern.permute.xlu0 0
        %3270 = vperm.xlu0 %3269, %v2025
        %v3271 = vpop.permute.xlu0 %3270
        %3272 = vset.pattern.permute.xlu0 0
        %3273 = vperm.xlu0 %3272, %v2074
        %v3274 = vpop.permute.xlu0 %3273
        %3275 = vset.pattern.permute.xlu0 0
        %3276 = vperm.xlu0 %3275, %v2123
        %v3277 = vpop.permute.xlu0 %3276
        %3278 = vset.pattern.permute.xlu0 0
        %3279 = vperm.xlu0 %3278, %v2172
        %v3280 = vpop.permute.xlu0 %3279
        %3281 = vset.pattern.permute.xlu0 0
        %3282 = vperm.xlu0 %3281, %v2221
        %v3283 = vpop.permute.xlu0 %3282
        %3284 = vset.pattern.permute.xlu0 0
        %3285 = vperm.xlu0 %3284, %v2270
        %v3286 = vpop.permute.xlu0 %3285
        %3287 = vset.pattern.permute.xlu0 0
        %3288 = vperm.xlu0 %3287, %v2319
        %v3289 = vpop.permute.xlu0 %3288
        %3290 = vset.pattern.permute.xlu0 0
        %3291 = vperm.xlu0 %3290, %v2368
        %v3292 = vpop.permute.xlu0 %3291
        %3293 = vset.pattern.permute.xlu0 0
        %3294 = vperm.xlu0 %3293, %v2417
        %v3295 = vpop.permute.xlu0 %3294
        %3296 = vset.pattern.permute.xlu0 0
        %3297 = vperm.xlu0 %3296, %v2466
        %v3298 = vpop.permute.xlu0 %3297
        %3299 = vset.pattern.permute.xlu0 0
        %3300 = vperm.xlu0 %3299, %v2515
        %v3301 = vpop.permute.xlu0 %3300
        %3302 = vset.pattern.permute.xlu0 0
        %3303 = vperm.xlu0 %3302, %v2564
        %v3304 = vpop.permute.xlu0 %3303
        %3305 = vset.pattern.permute.xlu0 0
        %3306 = vperm.xlu0 %3305, %v2613
        %v3307 = vpop.permute.xlu0 %3306
        %3308 = vset.pattern.permute.xlu0 0
        %3309 = vperm.xlu0 %3308, %v2662
        %v3310 = vpop.permute.xlu0 %3309
        %3311 = vset.pattern.permute.xlu0 0
        %3312 = vperm.xlu0 %3311, %v2711
        %v3313 = vpop.permute.xlu0 %3312
        %3314 = vset.pattern.permute.xlu0 0
        %3315 = vperm.xlu0 %3314, %v2760
        %v3316 = vpop.permute.xlu0 %3315
        %3317 = vset.pattern.permute.xlu0 0
        %3318 = vperm.xlu0 %3317, %v2809
        %v3319 = vpop.permute.xlu0 %3318
        %3320 = vset.pattern.permute.xlu0 0
        %3321 = vperm.xlu0 %3320, %v2858
        %v3322 = vpop.permute.xlu0 %3321
        %3323 = vset.pattern.permute.xlu0 0
        %3324 = vperm.xlu0 %3323, %v2907
        %v3325 = vpop.permute.xlu0 %3324
        %3326 = vset.pattern.permute.xlu0 0
        %3327 = vperm.xlu0 %3326, %v2956
        %v3328 = vpop.permute.xlu0 %3327
        %3329 = vset.pattern.permute.xlu0 0
        %3330 = vperm.xlu0 %3329, %v3005
        %v3331 = vpop.permute.xlu0 %3330
        %3332 = vset.pattern.permute.xlu0 0
        %3333 = vperm.xlu0 %3332, %v3054
        %v3334 = vpop.permute.xlu0 %3333
        %3335 = vset.pattern.permute.xlu0 0
        %3336 = vperm.xlu0 %3335, %v3103
        %v3337 = vpop.permute.xlu0 %3336
        %3338 = vset.pattern.permute.xlu0 0
        %3339 = vperm.xlu0 %3338, %v3152
        %v3340 = vpop.permute.xlu0 %3339
        %3341 = vset.pattern.permute.xlu0 0
        %3342 = vperm.xlu0 %3341, %v3201
        %v3343 = vpop.permute.xlu0 %3342
        %3344 = vset.pattern.permute.xlu0 0
        %3345 = vperm.xlu0 %3344, %v3250
        %v3346 = vpop.permute.xlu0 %3345
        %v3347 = vlaneseq
        %v3348 = vand.u32 %v3347, 127
        %v3349 = vlaneseq
        %v3350 = vshrl.u32 %v3349, 7
        %v3351 = vsub.s32 %v3348, %v3350
        %v3352 = vrot.slane %v3253, %v3351
        %v3353 = vadd.s32 %v3348, 4294967288
        %v3354 = vlaneseq
        %v3355 = vshrl.u32 %v3354, 7
        %v3356 = vsub.s32 %v3353, %v3355
        %v3357 = vrot.slane %v3256, %v3356
        %vm3358 = vcmask 130112
        %v3359 = vsel %vm3358, %v3357, %v3352
        %v3360 = vadd.s32 %v3348, 4294967280
        %v3361 = vlaneseq
        %v3362 = vshrl.u32 %v3361, 7
        %v3363 = vsub.s32 %v3360, %v3362
        %v3364 = vrot.slane %v3259, %v3363
        %vm3365 = vcmask 195712
        %v3366 = vsel %vm3365, %v3364, %v3359
        %v3367 = vadd.s32 %v3348, 4294967272
        %v3368 = vlaneseq
        %v3369 = vshrl.u32 %v3368, 7
        %v3370 = vsub.s32 %v3367, %v3369
        %v3371 = vrot.slane %v3262, %v3370
        %vm3372 = vcmask 261312
        %v3373 = vsel %vm3372, %v3371, %v3366
        %v3374 = vadd.s32 %v3348, 4294967264
        %v3375 = vlaneseq
        %v3376 = vshrl.u32 %v3375, 7
        %v3377 = vsub.s32 %v3374, %v3376
        %v3378 = vrot.slane %v3265, %v3377
        %vm3379 = vcmask 326912
        %v3380 = vsel %vm3379, %v3378, %v3373
        %v3381 = vadd.s32 %v3348, 4294967256
        %v3382 = vlaneseq
        %v3383 = vshrl.u32 %v3382, 7
        %v3384 = vsub.s32 %v3381, %v3383
        %v3385 = vrot.slane %v3268, %v3384
        %vm3386 = vcmask 392512
        %v3387 = vsel %vm3386, %v3385, %v3380
        %v3388 = vadd.s32 %v3348, 4294967248
        %v3389 = vlaneseq
        %v3390 = vshrl.u32 %v3389, 7
        %v3391 = vsub.s32 %v3388, %v3390
        %v3392 = vrot.slane %v3271, %v3391
        %vm3393 = vcmask 458112
        %v3394 = vsel %vm3393, %v3392, %v3387
        %v3395 = vadd.s32 %v3348, 4294967240
        %v3396 = vlaneseq
        %v3397 = vshrl.u32 %v3396, 7
        %v3398 = vsub.s32 %v3395, %v3397
        %v3399 = vrot.slane %v3274, %v3398
        %vm3400 = vcmask 523712
        %v3401 = vsel %vm3400, %v3399, %v3394
        %v3402 = vadd.s32 %v3348, 4294967232
        %v3403 = vlaneseq
        %v3404 = vshrl.u32 %v3403, 7
        %v3405 = vsub.s32 %v3402, %v3404
        %v3406 = vrot.slane %v3277, %v3405
        %vm3407 = vcmask 589312
        %v3408 = vsel %vm3407, %v3406, %v3401
        %v3409 = vadd.s32 %v3348, 4294967224
        %v3410 = vlaneseq
        %v3411 = vshrl.u32 %v3410, 7
        %v3412 = vsub.s32 %v3409, %v3411
        %v3413 = vrot.slane %v3280, %v3412
        %vm3414 = vcmask 654912
        %v3415 = vsel %vm3414, %v3413, %v3408
        %v3416 = vadd.s32 %v3348, 4294967216
        %v3417 = vlaneseq
        %v3418 = vshrl.u32 %v3417, 7
        %v3419 = vsub.s32 %v3416, %v3418
        %v3420 = vrot.slane %v3283, %v3419
        %vm3421 = vcmask 720512
        %v3422 = vsel %vm3421, %v3420, %v3415
        %v3423 = vadd.s32 %v3348, 4294967208
        %v3424 = vlaneseq
        %v3425 = vshrl.u32 %v3424, 7
        %v3426 = vsub.s32 %v3423, %v3425
        %v3427 = vrot.slane %v3286, %v3426
        %vm3428 = vcmask 786112
        %v3429 = vsel %vm3428, %v3427, %v3422
        %v3430 = vadd.s32 %v3348, 4294967200
        %v3431 = vlaneseq
        %v3432 = vshrl.u32 %v3431, 7
        %v3433 = vsub.s32 %v3430, %v3432
        %v3434 = vrot.slane %v3289, %v3433
        %vm3435 = vcmask 851712
        %v3436 = vsel %vm3435, %v3434, %v3429
        %v3437 = vadd.s32 %v3348, 4294967192
        %v3438 = vlaneseq
        %v3439 = vshrl.u32 %v3438, 7
        %v3440 = vsub.s32 %v3437, %v3439
        %v3441 = vrot.slane %v3292, %v3440
        %vm3442 = vcmask 917312
        %v3443 = vsel %vm3442, %v3441, %v3436
        %v3444 = vadd.s32 %v3348, 4294967184
        %v3445 = vlaneseq
        %v3446 = vshrl.u32 %v3445, 7
        %v3447 = vsub.s32 %v3444, %v3446
        %v3448 = vrot.slane %v3295, %v3447
        %vm3449 = vcmask 982912
        %v3450 = vsel %vm3449, %v3448, %v3443
        %v3451 = vadd.s32 %v3348, 4294967176
        %v3452 = vlaneseq
        %v3453 = vshrl.u32 %v3452, 7
        %v3454 = vsub.s32 %v3451, %v3453
        %v3455 = vrot.slane %v3298, %v3454
        %vm3456 = vcmask 1048512
        %v3457 = vsel %vm3456, %v3455, %v3450
        %v3458 = vlaneseq
        %v3459 = vshrl.u32 %v3458, 7
        %v3460 = vsub.s32 %v3348, %v3459
        %v3461 = vrot.slane %v3301, %v3460
        %v3462 = vlaneseq
        %v3463 = vshrl.u32 %v3462, 7
        %v3464 = vsub.s32 %v3353, %v3463
        %v3465 = vrot.slane %v3304, %v3464
        %v3466 = vsel %vm3358, %v3465, %v3461
        %v3467 = vlaneseq
        %v3468 = vshrl.u32 %v3467, 7
        %v3469 = vsub.s32 %v3360, %v3468
        %v3470 = vrot.slane %v3307, %v3469
        %v3471 = vsel %vm3365, %v3470, %v3466
        %v3472 = vlaneseq
        %v3473 = vshrl.u32 %v3472, 7
        %v3474 = vsub.s32 %v3367, %v3473
        %v3475 = vrot.slane %v3310, %v3474
        %v3476 = vsel %vm3372, %v3475, %v3471
        %v3477 = vlaneseq
        %v3478 = vshrl.u32 %v3477, 7
        %v3479 = vsub.s32 %v3374, %v3478
        %v3480 = vrot.slane %v3313, %v3479
        %v3481 = vsel %vm3379, %v3480, %v3476
        %v3482 = vlaneseq
        %v3483 = vshrl.u32 %v3482, 7
        %v3484 = vsub.s32 %v3381, %v3483
        %v3485 = vrot.slane %v3316, %v3484
        %v3486 = vsel %vm3386, %v3485, %v3481
        %v3487 = vlaneseq
        %v3488 = vshrl.u32 %v3487, 7
        %v3489 = vsub.s32 %v3388, %v3488
        %v3490 = vrot.slane %v3319, %v3489
        %v3491 = vsel %vm3393, %v3490, %v3486
        %v3492 = vlaneseq
        %v3493 = vshrl.u32 %v3492, 7
        %v3494 = vsub.s32 %v3395, %v3493
        %v3495 = vrot.slane %v3322, %v3494
        %v3496 = vsel %vm3400, %v3495, %v3491
        %v3497 = vlaneseq
        %v3498 = vshrl.u32 %v3497, 7
        %v3499 = vsub.s32 %v3402, %v3498
        %v3500 = vrot.slane %v3325, %v3499
        %v3501 = vsel %vm3407, %v3500, %v3496
        %v3502 = vlaneseq
        %v3503 = vshrl.u32 %v3502, 7
        %v3504 = vsub.s32 %v3409, %v3503
        %v3505 = vrot.slane %v3328, %v3504
        %v3506 = vsel %vm3414, %v3505, %v3501
        %v3507 = vlaneseq
        %v3508 = vshrl.u32 %v3507, 7
        %v3509 = vsub.s32 %v3416, %v3508
        %v3510 = vrot.slane %v3331, %v3509
        %v3511 = vsel %vm3421, %v3510, %v3506
        %v3512 = vlaneseq
        %v3513 = vshrl.u32 %v3512, 7
        %v3514 = vsub.s32 %v3423, %v3513
        %v3515 = vrot.slane %v3334, %v3514
        %v3516 = vsel %vm3428, %v3515, %v3511
        %v3517 = vlaneseq
        %v3518 = vshrl.u32 %v3517, 7
        %v3519 = vsub.s32 %v3430, %v3518
        %v3520 = vrot.slane %v3337, %v3519
        %v3521 = vsel %vm3435, %v3520, %v3516
        %v3522 = vlaneseq
        %v3523 = vshrl.u32 %v3522, 7
        %v3524 = vsub.s32 %v3437, %v3523
        %v3525 = vrot.slane %v3340, %v3524
        %v3526 = vsel %vm3442, %v3525, %v3521
        %v3527 = vlaneseq
        %v3528 = vshrl.u32 %v3527, 7
        %v3529 = vsub.s32 %v3444, %v3528
        %v3530 = vrot.slane %v3343, %v3529
        %v3531 = vsel %vm3449, %v3530, %v3526
        %v3532 = vlaneseq
        %v3533 = vshrl.u32 %v3532, 7
        %v3534 = vsub.s32 %v3451, %v3533
        %v3535 = vrot.slane %v3346, %v3534
        %v3536 = vsel %vm3456, %v3535, %v3531
        %v3537 = vcombine.low %v3457, %v3536
        %v3539 = vunpack.c.l.s4 1966171168
        %v3540 = vunpack.c.0.s8 %v3539
        %v3541 = vlaneseq
        %v3542 = vshrl.u32 %v3541, 7
        %v3543 = vsub.s32 %v3540, %v3542
        %v3544 = vrot.slane %v3537, %v3543
        %v3546 = vunpack.c.l.s4 1966171168
        %v3547 = vunpack.c.0.s8 %v3546
        %v3548 = vlaneseq
        %v3549 = vshrl.u32 %v3548, 7
        %v3550 = vsub.s32 %v3547, %v3549
        %v3551 = vrot.slane %v3544, %v3550
        %v3553 = vlaneseq
        %vm3554 = vcmp.ge.s32.totalorder %v3553, 0
        %vm3555 = vcmp.lt.s32.totalorder %v3553, 256
        %vm3556 = vmand %vm3554, %vm3555
        %3557 = vst.msk [vmem:[%s202] sm:$0x3] %vm3556, %v3551
        %s3558 = smul.u32 2, %s21
        %p3559 = scmp.lt.s32.totalorder %s20, 1
        %s3560 = scalar_select %p3559, %s20, 1
        %p3561 = scmp.lt.s32.totalorder %s3558, 1
        %s3562 = scalar_select %p3561, %s3558, 1
        %s3563 = smul.addr %s3560, 2
        %s3564 = sadd.s32 %s3562, %s3563
        %s3565 = scalar_lea.vmem %s2, %s3564
        // Predicated region
        $region33: #{proto_matcher.1} parent=27 // pred_check
          %p3566 = pneg %p102
        $region34: #{proto_matcher.1} parent=27 // pred_check_branch
          %3568 = sbr.rel (%p3566) target = $region36
        $region35: #{proto_matcher.1} parent=27 // pred_region
          %s3569 = smul.u32 2, %s21
        $region36: #{proto_matcher.1} parent=27 // pred_fallthru
          _
      $region28: #{proto_matcher.1} parent=5 // pred_fallthru
        _
      %p3570 = scmp.le.s32.totalorder 2, %s11
      // Predicated region
      $region37: #{proto_matcher.1} parent=5 // pred_check
        %p3571 = pneg %p3570
      $region38: #{proto_matcher.1} parent=5 // pred_check_branch
        %3573 = sbr.rel (%p3571) target = $region40
      $region39: #{proto_matcher.1} parent=5 // pred_region
        %s3574 = ssub.s32 %s11, 2
        // Predicated region
        $region41: #{proto_matcher.1} parent=39 // pred_check
          %p3575 = pneg %p108
        $region42: #{proto_matcher.1} parent=39 // pred_check_branch
          %3577 = sbr.rel (%p3575) target = $region44
        $region43: #{proto_matcher.1} parent=39 // pred_region
          %s3578 = smul.u32 2, %s23
          %p3579 = scmp.lt.s32.totalorder %s22, 1
          %s3580 = scalar_select %p3579, %s22, 1
          %p3581 = scmp.lt.s32.totalorder %s3578, 1
          %s3582 = scalar_select %p3581, %s3578, 1
          %s3583 = smul.addr %s3580, 2
          %s3584 = sadd.s32 %s3582, %s3583
          %s3585 = scalar_lea.vmem %s2, %s3584
        $region44: #{proto_matcher.1} parent=39 // pred_fallthru
          _
      $region40: #{proto_matcher.1} parent=5 // pred_fallthru
        _
    $region6: #{proto_matcher.1} parent=1 // loop_footer
      %s15 = sadd.s32 1, %s11
    $region7: #{proto_matcher.1} parent=1 // loop_footer_branch
      %10 = sbr.rel target = $region3
    $region8: #{proto_matcher.1} parent=1 // loop_exit
      _
    %3586 = vsyncpa [#allocation3], 1
    %s3587 = scalar_lea.sflag [#allocation3], 1
    %3588 = vsyncpa %s3587, 1

</llo_original>
